<compile_context>
chip_gen: v6e
topology: v6e:2x2x1
jax: 0.10.0
libtpu: 0.0.40
codegen_flags: <defaults>
</compile_context>

<pallas_src>
import functools

import jax
import jax.numpy as jnp
from jax.experimental import pallas as pl
from jax.experimental.pallas import tpu as pltpu

EPS = 1e-5


def _round_up(v, m):
    return (v + m - 1) // m * m


def _conv_taps(x, w_ref, kh, kw, Wp, M):
    """Implicit-im2col conv: sum of kh*kw shifted GEMMs -> (Cout_p, M) f32.

    x      : (Cin, L) bf16 value loaded from VMEM (L >= M + (kh-1)*Wp + kw-1)
    w_ref  : (kh*kw, Cout_p, Cin) bf16 ref
    """
    y = None
    for i in range(kh):
        for j in range(kw):
            s = i * Wp + j                     # static flat shift of this tap
            xs = x[:, s:s + M]                 # (Cin, M) bf16, lane shift only
            wk = w_ref[i * kw + j]             # (Cout_p, Cin) bf16
            t = jnp.dot(wk, xs, preferred_element_type=jnp.float32)
            y = t if y is None else y + t
    return y


def _stats_kernel(x_ref, w_ref, mask_ref, sum_ref, ssq_ref, *, kh, kw, Wp, M):
    # x_ref   : (1, Cin, L) bf16      w_ref : (kh*kw, Cout_p, Cin) bf16
    # mask_ref: (1, M) f32 (1.0 on valid output anchors, else 0.0)
    # sum_ref / ssq_ref : (1, Cout_p, 1) f32  -- per-image partial BN stats
    x = x_ref[0]
    y = _conv_taps(x, w_ref, kh, kw, Wp, M)            # (Cout_p, M) f32
    ym = y * mask_ref[...]                             # mask invalid anchors
    sum_ref[0] = jnp.sum(ym, axis=1, keepdims=True)    # (Cout_p, 1)
    ssq_ref[0] = jnp.sum(y * ym, axis=1, keepdims=True)


def _norm_kernel(x_ref, w_ref, scale_ref, bias_ref, o_ref, *, kh, kw, Wp, M):
    # Recompute the cheap conv, then fused BN-affine + ReLU (lane-dense store).
    x = x_ref[0]
    y = _conv_taps(x, w_ref, kh, kw, Wp, M)            # (Cout_p, M) f32
    out = jnp.maximum(y * scale_ref[...] + bias_ref[...], 0.0)
    o_ref[0] = out.astype(o_ref.dtype)


def basic_conv_forward(x_nchw, weight_oihw, gamma, beta, *, stride=1, padding=0):
    """BasicConv.forward: conv2d(bias=False) -> BatchNorm2d(train) -> ReLU."""
    N, Cin, H, W = x_nchw.shape
    Cout, Cin_w, kh, kw = weight_oihw.shape
    assert Cin == Cin_w, "groups != 1 not supported"
    Hout = (H + 2 * padding - kh) // stride + 1
    Wout = (W + 2 * padding - kw) // stride + 1
    Hp, Wp = H + 2 * padding, W + 2 * padding
    HWp = Hp * Wp

    Cout_p = _round_up(Cout, 8)            # sublane-aligned output channels
    M = _round_up(HWp, 128)                # lane-dense anchor axis per image
    margin = (kh - 1) * Wp + (kw - 1)      # max flat shift of a conv tap
    L = _round_up(M + margin, 128)

    # ---- inputs: pad once, flatten spatial; NO im2col, NO transpose of x ----
    xp = jnp.pad(x_nchw, ((0, 0), (0, 0), (padding, padding), (padding, padding)))
    x_flat = xp.reshape(N, Cin, HWp)
    x_flat = jnp.pad(x_flat, ((0, 0), (0, 0), (0, L - HWp))).astype(jnp.bfloat16)

    # weights per tap: (kh*kw, Cout_p, Cin) bf16
    w_k = weight_oihw.transpose(2, 3, 0, 1).reshape(kh * kw, Cout, Cin)
    w_k = jnp.pad(w_k, ((0, 0), (0, Cout_p - Cout), (0, 0))).astype(jnp.bfloat16)

    # validity mask over anchor positions (BN stats ignore over-computed /
    # padded anchors; with stride>1 only every stride-th anchor is valid)
    p = jnp.arange(M)
    hh = p // Wp
    ww = p % Wp
    valid = ((p < HWp)
             & (hh % stride == 0) & (hh // stride < Hout)
             & (ww % stride == 0) & (ww // stride < Wout))
    mask = valid.astype(jnp.float32).reshape(1, M)

    nkk = kh * kw
    cparams = pltpu.CompilerParams(
        dimension_semantics=("parallel",),            # megacore-friendly (v7x)
        vmem_limit_bytes=32 * 1024 * 1024)            # explicit, v7x-safe

    # ---- pass 1: per-image per-channel sum / sum-of-squares ----
    sum_n, ssq_n = pl.pallas_call(
        functools.partial(_stats_kernel, kh=kh, kw=kw, Wp=Wp, M=M),
        out_shape=(jax.ShapeDtypeStruct((N, Cout_p, 1), jnp.float32),
                   jax.ShapeDtypeStruct((N, Cout_p, 1), jnp.float32)),
        grid=(N,),
        in_specs=[
            pl.BlockSpec((1, Cin, L), lambda n: (n, 0, 0)),
            pl.BlockSpec((nkk, Cout_p, Cin), lambda n: (0, 0, 0)),
            pl.BlockSpec((1, M), lambda n: (0, 0)),
        ],
        out_specs=(pl.BlockSpec((1, Cout_p, 1), lambda n: (n, 0, 0)),
                   pl.BlockSpec((1, Cout_p, 1), lambda n: (n, 0, 0))),
        compiler_params=cparams,
    )(x_flat, w_k, mask)

    # ---- fold BN into per-channel scale / bias (tiny f32 math in wrapper) ----
    count = float(N * Hout * Wout)
    s1 = jnp.sum(sum_n[..., 0], axis=0)               # (Cout_p,)
    s2 = jnp.sum(ssq_n[..., 0], axis=0)               # (Cout_p,)
    mean = s1 / count
    var = jnp.maximum(s2 / count - mean * mean, 0.0)  # biased var (train BN)
    gamma_p = jnp.pad(gamma.astype(jnp.float32), (0, Cout_p - Cout))
    beta_p = jnp.pad(beta.astype(jnp.float32), (0, Cout_p - Cout))
    scale = gamma_p * jax.lax.rsqrt(var + EPS)
    bias = beta_p - mean * scale
    scale2d = scale.reshape(Cout_p, 1)
    bias2d = bias.reshape(Cout_p, 1)

    # ---- pass 2: conv (recomputed) + scale/bias + ReLU, (Cout, M) output ----
    y = pl.pallas_call(
        functools.partial(_norm_kernel, kh=kh, kw=kw, Wp=Wp, M=M),
        out_shape=jax.ShapeDtypeStruct((N, Cout_p, M), jnp.float32),
        grid=(N,),
        in_specs=[
            pl.BlockSpec((1, Cin, L), lambda n: (n, 0, 0)),
            pl.BlockSpec((nkk, Cout_p, Cin), lambda n: (0, 0, 0)),
            pl.BlockSpec((Cout_p, 1), lambda n: (0, 0)),
            pl.BlockSpec((Cout_p, 1), lambda n: (0, 0)),
        ],
        out_specs=pl.BlockSpec((1, Cout_p, M), lambda n: (n, 0, 0)),
        compiler_params=cparams,
    )(x_flat, w_k, scale2d, bias2d)

    # ---- output is already NCHW-flat: just slice valid anchors ----
    y4 = y[:, :Cout, :HWp].reshape(N, Cout, Hp, Wp)
    return y4[:, :, :(Hout - 1) * stride + 1:stride,
                 :(Wout - 1) * stride + 1:stride]


def _reference(x, weight, gamma, beta, *, stride, padding, cast_bf16):
    if cast_bf16:  # same precision tradeoff as the kernel's MXU inputs
        x = x.astype(jnp.bfloat16).astype(jnp.float32)
        weight = weight.astype(jnp.bfloat16).astype(jnp.float32)
    y = jax.lax.conv_general_dilated(
        x, weight, window_strides=(stride, stride),
        padding=((padding, padding), (padding, padding)),
        dimension_numbers=("NCHW", "OIHW", "NCHW"))
    mean = y.mean(axis=(0, 2, 3), keepdims=True)
    var = jnp.square(y - mean).mean(axis=(0, 2, 3), keepdims=True)
    y = (y - mean) / jnp.sqrt(var + EPS)
    y = gamma[None, :, None, None] * y + beta[None, :, None, None]
    return jnp.maximum(y, 0.0)


if __name__ == "__main__":
    # BasicConv(in_planes=4, out_planes=8, kernel_size=3, stride=1, padding=1)
    in_planes, out_planes, ksize, stride, padding = 4, 8, 3, 1, 1
    key = jax.random.PRNGKey(0)
    kx, kw_, kg, kb = jax.random.split(key, 4)

    x = jax.random.normal(kx, (2, in_planes, 16, 16), dtype=jnp.float32)
    weight = 0.1 * jax.random.normal(kw_, (out_planes, in_planes, ksize, ksize),
                                     dtype=jnp.float32)
    gamma = 0.5 + jax.random.uniform(kg, (out_planes,), dtype=jnp.float32)
    beta = 0.1 * jax.random.normal(kb, (out_planes,), dtype=jnp.float32)

    fwd = jax.jit(functools.partial(basic_conv_forward,
                                    stride=stride, padding=padding))
    out = jax.block_until_ready(fwd(x, weight, gamma, beta))
    assert out.shape == (2, out_planes, 16, 16), out.shape

    # Tight check against a reference using the same bf16-rounded conv inputs.
    ref_bf = _reference(x, weight, gamma, beta, stride=stride, padding=padding,
                        cast_bf16=True)
    assert jnp.allclose(out, ref_bf, rtol=2e-3, atol=2e-3), \
        f"max abs diff (bf16 ref) = {jnp.max(jnp.abs(out - ref_bf))}"

    # Looser check against the pure-f32 module semantics (bf16 MXU tradeoff).
    ref_f32 = _reference(x, weight, gamma, beta, stride=stride, padding=padding,
                         cast_bf16=False)
    assert jnp.allclose(out, ref_f32, rtol=5e-2, atol=5e-2), \
        f"max abs diff (f32 ref) = {jnp.max(jnp.abs(out - ref_f32))}"

    print("KERNEL_OK")
</pallas_src>

<mosaic_0001>
module attributes {stable_mosaic.version = 11 : i64} {
  func.func @_stats_kernel(%arg0: i32, %arg1: memref<1x4x512xbf16, #tpu.memory_space<vmem>>, %arg2: memref<9x8x4xbf16, #tpu.memory_space<vmem>>, %arg3: memref<1x384xf32, #tpu.memory_space<vmem>>, %arg4: memref<1x8x1xf32, #tpu.memory_space<vmem>>, %arg5: memref<1x8x1xf32, #tpu.memory_space<vmem>>) attributes {dimension_semantics = [#tpu.dimension_semantics<parallel>], iteration_bounds = array<i64: 2>, scalar_prefetch = 0 : i64, scratch_operands = 0 : i64, tpu.core_type = #tpu.core_type<tc>, window_params = [{transform_indices = @transform_0, window_bounds = array<i64: 1, 4, 512>}, {pipeline_mode = #tpu.pipeline_mode<synchronous>, transform_indices = @transform_1, window_bounds = array<i64: 9, 8, 4>}, {pipeline_mode = #tpu.pipeline_mode<synchronous>, transform_indices = @transform_2, window_bounds = array<i64: 1, 384>}, {transform_indices = @transform_3, window_bounds = array<i64: 1, 8, 1>}, {transform_indices = @transform_4, window_bounds = array<i64: 1, 8, 1>}]} {
    %c0 = arith.constant 0 : index
    %c0_0 = arith.constant 0 : index
    %c0_1 = arith.constant 0 : index
    %0 = vector.load %arg1[%c0, %c0_0, %c0_1] : memref<1x4x512xbf16, #tpu.memory_space<vmem>>, vector<1x4x512xbf16>
    %1 = vector.shape_cast %0 : vector<1x4x512xbf16> to vector<4x512xbf16>
    %2 = vector.extract_strided_slice %1 {offsets = [0, 0], sizes = [4, 384], strides = [1, 1]} : vector<4x512xbf16> to vector<4x384xbf16>
    %c0_2 = arith.constant 0 : index
    %c0_3 = arith.constant 0 : index
    %c0_4 = arith.constant 0 : index
    %3 = vector.load %arg2[%c0_2, %c0_3, %c0_4] : memref<9x8x4xbf16, #tpu.memory_space<vmem>>, vector<1x8x4xbf16>
    %4 = vector.shape_cast %3 : vector<1x8x4xbf16> to vector<8x4xbf16>
    %cst = arith.constant dense<0.000000e+00> : vector<8x384xf32>
    %5 = tpu.matmul %4, %2, %cst {dimension_numbers = #tpu.dot_dimension_numbers<[1], [0], [0], [1], [0, 0, 1, 1], [], []>} : vector<8x4xbf16>, vector<4x384xbf16>, vector<8x384xf32> -> vector<8x384xf32>
    %6 = vector.extract_strided_slice %1 {offsets = [0, 1], sizes = [4, 384], strides = [1, 1]} : vector<4x512xbf16> to vector<4x384xbf16>
    %c1 = arith.constant 1 : index
    %c0_5 = arith.constant 0 : index
    %c0_6 = arith.constant 0 : index
    %7 = vector.load %arg2[%c1, %c0_5, %c0_6] : memref<9x8x4xbf16, #tpu.memory_space<vmem>>, vector<1x8x4xbf16>
    %8 = vector.shape_cast %7 : vector<1x8x4xbf16> to vector<8x4xbf16>
    %cst_7 = arith.constant dense<0.000000e+00> : vector<8x384xf32>
    %9 = tpu.matmul %8, %6, %cst_7 {dimension_numbers = #tpu.dot_dimension_numbers<[1], [0], [0], [1], [0, 0, 1, 1], [], []>} : vector<8x4xbf16>, vector<4x384xbf16>, vector<8x384xf32> -> vector<8x384xf32>
    %10 = arith.addf %5, %9 : vector<8x384xf32>
    %11 = vector.extract_strided_slice %1 {offsets = [0, 2], sizes = [4, 384], strides = [1, 1]} : vector<4x512xbf16> to vector<4x384xbf16>
    %c2 = arith.constant 2 : index
    %c0_8 = arith.constant 0 : index
    %c0_9 = arith.constant 0 : index
    %12 = vector.load %arg2[%c2, %c0_8, %c0_9] : memref<9x8x4xbf16, #tpu.memory_space<vmem>>, vector<1x8x4xbf16>
    %13 = vector.shape_cast %12 : vector<1x8x4xbf16> to vector<8x4xbf16>
    %cst_10 = arith.constant dense<0.000000e+00> : vector<8x384xf32>
    %14 = tpu.matmul %13, %11, %cst_10 {dimension_numbers = #tpu.dot_dimension_numbers<[1], [0], [0], [1], [0, 0, 1, 1], [], []>} : vector<8x4xbf16>, vector<4x384xbf16>, vector<8x384xf32> -> vector<8x384xf32>
    %15 = arith.addf %10, %14 : vector<8x384xf32>
    %16 = vector.extract_strided_slice %1 {offsets = [0, 18], sizes = [4, 384], strides = [1, 1]} : vector<4x512xbf16> to vector<4x384xbf16>
    %c3 = arith.constant 3 : index
    %c0_11 = arith.constant 0 : index
    %c0_12 = arith.constant 0 : index
    %17 = vector.load %arg2[%c3, %c0_11, %c0_12] : memref<9x8x4xbf16, #tpu.memory_space<vmem>>, vector<1x8x4xbf16>
    %18 = vector.shape_cast %17 : vector<1x8x4xbf16> to vector<8x4xbf16>
    %cst_13 = arith.constant dense<0.000000e+00> : vector<8x384xf32>
    %19 = tpu.matmul %18, %16, %cst_13 {dimension_numbers = #tpu.dot_dimension_numbers<[1], [0], [0], [1], [0, 0, 1, 1], [], []>} : vector<8x4xbf16>, vector<4x384xbf16>, vector<8x384xf32> -> vector<8x384xf32>
    %20 = arith.addf %15, %19 : vector<8x384xf32>
    %21 = vector.extract_strided_slice %1 {offsets = [0, 19], sizes = [4, 384], strides = [1, 1]} : vector<4x512xbf16> to vector<4x384xbf16>
    %c4 = arith.constant 4 : index
    %c0_14 = arith.constant 0 : index
    %c0_15 = arith.constant 0 : index
    %22 = vector.load %arg2[%c4, %c0_14, %c0_15] : memref<9x8x4xbf16, #tpu.memory_space<vmem>>, vector<1x8x4xbf16>
    %23 = vector.shape_cast %22 : vector<1x8x4xbf16> to vector<8x4xbf16>
    %cst_16 = arith.constant dense<0.000000e+00> : vector<8x384xf32>
    %24 = tpu.matmul %23, %21, %cst_16 {dimension_numbers = #tpu.dot_dimension_numbers<[1], [0], [0], [1], [0, 0, 1, 1], [], []>} : vector<8x4xbf16>, vector<4x384xbf16>, vector<8x384xf32> -> vector<8x384xf32>
    %25 = arith.addf %20, %24 : vector<8x384xf32>
    %26 = vector.extract_strided_slice %1 {offsets = [0, 20], sizes = [4, 384], strides = [1, 1]} : vector<4x512xbf16> to vector<4x384xbf16>
    %c5 = arith.constant 5 : index
    %c0_17 = arith.constant 0 : index
    %c0_18 = arith.constant 0 : index
    %27 = vector.load %arg2[%c5, %c0_17, %c0_18] : memref<9x8x4xbf16, #tpu.memory_space<vmem>>, vector<1x8x4xbf16>
    %28 = vector.shape_cast %27 : vector<1x8x4xbf16> to vector<8x4xbf16>
    %cst_19 = arith.constant dense<0.000000e+00> : vector<8x384xf32>
    %29 = tpu.matmul %28, %26, %cst_19 {dimension_numbers = #tpu.dot_dimension_numbers<[1], [0], [0], [1], [0, 0, 1, 1], [], []>} : vector<8x4xbf16>, vector<4x384xbf16>, vector<8x384xf32> -> vector<8x384xf32>
    %30 = arith.addf %25, %29 : vector<8x384xf32>
    %31 = vector.extract_strided_slice %1 {offsets = [0, 36], sizes = [4, 384], strides = [1, 1]} : vector<4x512xbf16> to vector<4x384xbf16>
    %c6 = arith.constant 6 : index
    %c0_20 = arith.constant 0 : index
    %c0_21 = arith.constant 0 : index
    %32 = vector.load %arg2[%c6, %c0_20, %c0_21] : memref<9x8x4xbf16, #tpu.memory_space<vmem>>, vector<1x8x4xbf16>
    %33 = vector.shape_cast %32 : vector<1x8x4xbf16> to vector<8x4xbf16>
    %cst_22 = arith.constant dense<0.000000e+00> : vector<8x384xf32>
    %34 = tpu.matmul %33, %31, %cst_22 {dimension_numbers = #tpu.dot_dimension_numbers<[1], [0], [0], [1], [0, 0, 1, 1], [], []>} : vector<8x4xbf16>, vector<4x384xbf16>, vector<8x384xf32> -> vector<8x384xf32>
    %35 = arith.addf %30, %34 : vector<8x384xf32>
    %36 = vector.extract_strided_slice %1 {offsets = [0, 37], sizes = [4, 384], strides = [1, 1]} : vector<4x512xbf16> to vector<4x384xbf16>
    %c7 = arith.constant 7 : index
    %c0_23 = arith.constant 0 : index
    %c0_24 = arith.constant 0 : index
    %37 = vector.load %arg2[%c7, %c0_23, %c0_24] : memref<9x8x4xbf16, #tpu.memory_space<vmem>>, vector<1x8x4xbf16>
    %38 = vector.shape_cast %37 : vector<1x8x4xbf16> to vector<8x4xbf16>
    %cst_25 = arith.constant dense<0.000000e+00> : vector<8x384xf32>
    %39 = tpu.matmul %38, %36, %cst_25 {dimension_numbers = #tpu.dot_dimension_numbers<[1], [0], [0], [1], [0, 0, 1, 1], [], []>} : vector<8x4xbf16>, vector<4x384xbf16>, vector<8x384xf32> -> vector<8x384xf32>
    %40 = arith.addf %35, %39 : vector<8x384xf32>
    %41 = vector.extract_strided_slice %1 {offsets = [0, 38], sizes = [4, 384], strides = [1, 1]} : vector<4x512xbf16> to vector<4x384xbf16>
    %c8 = arith.constant 8 : index
    %c0_26 = arith.constant 0 : index
    %c0_27 = arith.constant 0 : index
    %42 = vector.load %arg2[%c8, %c0_26, %c0_27] : memref<9x8x4xbf16, #tpu.memory_space<vmem>>, vector<1x8x4xbf16>
    %43 = vector.shape_cast %42 : vector<1x8x4xbf16> to vector<8x4xbf16>
    %cst_28 = arith.constant dense<0.000000e+00> : vector<8x384xf32>
    %44 = tpu.matmul %43, %41, %cst_28 {dimension_numbers = #tpu.dot_dimension_numbers<[1], [0], [0], [1], [0, 0, 1, 1], [], []>} : vector<8x4xbf16>, vector<4x384xbf16>, vector<8x384xf32> -> vector<8x384xf32>
    %45 = arith.addf %40, %44 : vector<8x384xf32>
    %c0_29 = arith.constant 0 : index
    %c0_30 = arith.constant 0 : index
    %46 = vector.load %arg3[%c0_29, %c0_30] : memref<1x384xf32, #tpu.memory_space<vmem>>, vector<1x384xf32>
    %47 = vector.broadcast %46 : vector<1x384xf32> to vector<8x384xf32>
    %48 = arith.mulf %45, %47 : vector<8x384xf32>
    %cst_31 = arith.constant dense<0.000000e+00> : vector<8xf32>
    %49 = vector.multi_reduction <add>, %48, %cst_31 [1] : vector<8x384xf32> to vector<8xf32>
    %50 = vector.shape_cast %49 : vector<8xf32> to vector<8x1xf32>
    %c0_32 = arith.constant 0 : index
    %c0_33 = arith.constant 0 : index
    %c0_34 = arith.constant 0 : index
    %51 = vector.load %arg4[%c0_32, %c0_33, %c0_34] : memref<1x8x1xf32, #tpu.memory_space<vmem>>, vector<1x8x1xf32>
    %52 = vector.shape_cast %51 : vector<1x8x1xf32> to vector<8x1xf32>
    %53 = vector.shape_cast %50 : vector<8x1xf32> to vector<1x8x1xf32>
    tpu.vector_store %arg4[%c0_32, %c0_33, %c0_34], %53 {strides = array<i32>} : memref<1x8x1xf32, #tpu.memory_space<vmem>>, vector<1x8x1xf32>,
    %54 = arith.mulf %45, %48 : vector<8x384xf32>
    %cst_35 = arith.constant dense<0.000000e+00> : vector<8xf32>
    %55 = vector.multi_reduction <add>, %54, %cst_35 [1] : vector<8x384xf32> to vector<8xf32>
    %56 = vector.shape_cast %55 : vector<8xf32> to vector<8x1xf32>
    %c0_36 = arith.constant 0 : index
    %c0_37 = arith.constant 0 : index
    %c0_38 = arith.constant 0 : index
    %57 = vector.load %arg5[%c0_36, %c0_37, %c0_38] : memref<1x8x1xf32, #tpu.memory_space<vmem>>, vector<1x8x1xf32>
    %58 = vector.shape_cast %57 : vector<1x8x1xf32> to vector<8x1xf32>
    %59 = vector.shape_cast %56 : vector<8x1xf32> to vector<1x8x1xf32>
    tpu.vector_store %arg5[%c0_36, %c0_37, %c0_38], %59 {strides = array<i32>} : memref<1x8x1xf32, #tpu.memory_space<vmem>>, vector<1x8x1xf32>,
    return
  }
  func.func @transform_0(%arg0: i32) -> (i32, i32, i32) {
    %c0_i32 = arith.constant 0 : i32
    %c0_i32_0 = arith.constant 0 : i32
    %c0_i32_1 = arith.constant 0 : i32
    return %arg0, %c0_i32, %c0_i32_0 : i32, i32, i32
  }
  func.func @transform_1(%arg0: i32) -> (i32, i32, i32) {
    %c0_i32 = arith.constant 0 : i32
    %c0_i32_0 = arith.constant 0 : i32
    %c0_i32_1 = arith.constant 0 : i32
    %c0_i32_2 = arith.constant 0 : i32
    return %c0_i32, %c0_i32_0, %c0_i32_1 : i32, i32, i32
  }
  func.func @transform_2(%arg0: i32) -> (i32, i32) {
    %c0_i32 = arith.constant 0 : i32
    %c0_i32_0 = arith.constant 0 : i32
    %c0_i32_1 = arith.constant 0 : i32
    return %c0_i32, %c0_i32_0 : i32, i32
  }
  func.func @transform_3(%arg0: i32) -> (i32, i32, i32) {
    %c0_i32 = arith.constant 0 : i32
    %c0_i32_0 = arith.constant 0 : i32
    %c0_i32_1 = arith.constant 0 : i32
    return %arg0, %c0_i32, %c0_i32_0 : i32, i32, i32
  }
  func.func @transform_4(%arg0: i32) -> (i32, i32, i32) {
    %c0_i32 = arith.constant 0 : i32
    %c0_i32_0 = arith.constant 0 : i32
    %c0_i32_1 = arith.constant 0 : i32
    return %arg0, %c0_i32, %c0_i32_0 : i32, i32, i32
  }
}

module attributes {stable_mosaic.version = 11 : i64} {
  func.func @_norm_kernel(%arg0: i32, %arg1: memref<1x4x512xbf16, #tpu.memory_space<vmem>>, %arg2: memref<9x8x4xbf16, #tpu.memory_space<vmem>>, %arg3: memref<8x1xf32, #tpu.memory_space<vmem>>, %arg4: memref<8x1xf32, #tpu.memory_space<vmem>>, %arg5: memref<1x8x384xf32, #tpu.memory_space<vmem>>) attributes {dimension_semantics = [#tpu.dimension_semantics<parallel>], iteration_bounds = array<i64: 2>, scalar_prefetch = 0 : i64, scratch_operands = 0 : i64, tpu.core_type = #tpu.core_type<tc>, window_params = [{transform_indices = @transform_0, window_bounds = array<i64: 1, 4, 512>}, {pipeline_mode = #tpu.pipeline_mode<synchronous>, transform_indices = @transform_1, window_bounds = array<i64: 9, 8, 4>}, {pipeline_mode = #tpu.pipeline_mode<synchronous>, transform_indices = @transform_2, window_bounds = array<i64: 8, 1>}, {pipeline_mode = #tpu.pipeline_mode<synchronous>, transform_indices = @transform_3, window_bounds = array<i64: 8, 1>}, {transform_indices = @transform_4, window_bounds = array<i64: 1, 8, 384>}]} {
    %c0 = arith.constant 0 : index
    %c0_0 = arith.constant 0 : index
    %c0_1 = arith.constant 0 : index
    %0 = vector.load %arg1[%c0, %c0_0, %c0_1] : memref<1x4x512xbf16, #tpu.memory_space<vmem>>, vector<1x4x512xbf16>
    %1 = vector.shape_cast %0 : vector<1x4x512xbf16> to vector<4x512xbf16>
    %2 = vector.extract_strided_slice %1 {offsets = [0, 0], sizes = [4, 384], strides = [1, 1]} : vector<4x512xbf16> to vector<4x384xbf16>
    %c0_2 = arith.constant 0 : index
    %c0_3 = arith.constant 0 : index
    %c0_4 = arith.constant 0 : index
    %3 = vector.load %arg2[%c0_2, %c0_3, %c0_4] : memref<9x8x4xbf16, #tpu.memory_space<vmem>>, vector<1x8x4xbf16>
    %4 = vector.shape_cast %3 : vector<1x8x4xbf16> to vector<8x4xbf16>
    %cst = arith.constant dense<0.000000e+00> : vector<8x384xf32>
    %5 = tpu.matmul %4, %2, %cst {dimension_numbers = #tpu.dot_dimension_numbers<[1], [0], [0], [1], [0, 0, 1, 1], [], []>} : vector<8x4xbf16>, vector<4x384xbf16>, vector<8x384xf32> -> vector<8x384xf32>
    %6 = vector.extract_strided_slice %1 {offsets = [0, 1], sizes = [4, 384], strides = [1, 1]} : vector<4x512xbf16> to vector<4x384xbf16>
    %c1 = arith.constant 1 : index
    %c0_5 = arith.constant 0 : index
    %c0_6 = arith.constant 0 : index
    %7 = vector.load %arg2[%c1, %c0_5, %c0_6] : memref<9x8x4xbf16, #tpu.memory_space<vmem>>, vector<1x8x4xbf16>
    %8 = vector.shape_cast %7 : vector<1x8x4xbf16> to vector<8x4xbf16>
    %cst_7 = arith.constant dense<0.000000e+00> : vector<8x384xf32>
    %9 = tpu.matmul %8, %6, %cst_7 {dimension_numbers = #tpu.dot_dimension_numbers<[1], [0], [0], [1], [0, 0, 1, 1], [], []>} : vector<8x4xbf16>, vector<4x384xbf16>, vector<8x384xf32> -> vector<8x384xf32>
    %10 = arith.addf %5, %9 : vector<8x384xf32>
    %11 = vector.extract_strided_slice %1 {offsets = [0, 2], sizes = [4, 384], strides = [1, 1]} : vector<4x512xbf16> to vector<4x384xbf16>
    %c2 = arith.constant 2 : index
    %c0_8 = arith.constant 0 : index
    %c0_9 = arith.constant 0 : index
    %12 = vector.load %arg2[%c2, %c0_8, %c0_9] : memref<9x8x4xbf16, #tpu.memory_space<vmem>>, vector<1x8x4xbf16>
    %13 = vector.shape_cast %12 : vector<1x8x4xbf16> to vector<8x4xbf16>
    %cst_10 = arith.constant dense<0.000000e+00> : vector<8x384xf32>
    %14 = tpu.matmul %13, %11, %cst_10 {dimension_numbers = #tpu.dot_dimension_numbers<[1], [0], [0], [1], [0, 0, 1, 1], [], []>} : vector<8x4xbf16>, vector<4x384xbf16>, vector<8x384xf32> -> vector<8x384xf32>
    %15 = arith.addf %10, %14 : vector<8x384xf32>
    %16 = vector.extract_strided_slice %1 {offsets = [0, 18], sizes = [4, 384], strides = [1, 1]} : vector<4x512xbf16> to vector<4x384xbf16>
    %c3 = arith.constant 3 : index
    %c0_11 = arith.constant 0 : index
    %c0_12 = arith.constant 0 : index
    %17 = vector.load %arg2[%c3, %c0_11, %c0_12] : memref<9x8x4xbf16, #tpu.memory_space<vmem>>, vector<1x8x4xbf16>
    %18 = vector.shape_cast %17 : vector<1x8x4xbf16> to vector<8x4xbf16>
    %cst_13 = arith.constant dense<0.000000e+00> : vector<8x384xf32>
    %19 = tpu.matmul %18, %16, %cst_13 {dimension_numbers = #tpu.dot_dimension_numbers<[1], [0], [0], [1], [0, 0, 1, 1], [], []>} : vector<8x4xbf16>, vector<4x384xbf16>, vector<8x384xf32> -> vector<8x384xf32>
    %20 = arith.addf %15, %19 : vector<8x384xf32>
    %21 = vector.extract_strided_slice %1 {offsets = [0, 19], sizes = [4, 384], strides = [1, 1]} : vector<4x512xbf16> to vector<4x384xbf16>
    %c4 = arith.constant 4 : index
    %c0_14 = arith.constant 0 : index
    %c0_15 = arith.constant 0 : index
    %22 = vector.load %arg2[%c4, %c0_14, %c0_15] : memref<9x8x4xbf16, #tpu.memory_space<vmem>>, vector<1x8x4xbf16>
    %23 = vector.shape_cast %22 : vector<1x8x4xbf16> to vector<8x4xbf16>
    %cst_16 = arith.constant dense<0.000000e+00> : vector<8x384xf32>
    %24 = tpu.matmul %23, %21, %cst_16 {dimension_numbers = #tpu.dot_dimension_numbers<[1], [0], [0], [1], [0, 0, 1, 1], [], []>} : vector<8x4xbf16>, vector<4x384xbf16>, vector<8x384xf32> -> vector<8x384xf32>
    %25 = arith.addf %20, %24 : vector<8x384xf32>
    %26 = vector.extract_strided_slice %1 {offsets = [0, 20], sizes = [4, 384], strides = [1, 1]} : vector<4x512xbf16> to vector<4x384xbf16>
    %c5 = arith.constant 5 : index
    %c0_17 = arith.constant 0 : index
    %c0_18 = arith.constant 0 : index
    %27 = vector.load %arg2[%c5, %c0_17, %c0_18] : memref<9x8x4xbf16, #tpu.memory_space<vmem>>, vector<1x8x4xbf16>
    %28 = vector.shape_cast %27 : vector<1x8x4xbf16> to vector<8x4xbf16>
    %cst_19 = arith.constant dense<0.000000e+00> : vector<8x384xf32>
    %29 = tpu.matmul %28, %26, %cst_19 {dimension_numbers = #tpu.dot_dimension_numbers<[1], [0], [0], [1], [0, 0, 1, 1], [], []>} : vector<8x4xbf16>, vector<4x384xbf16>, vector<8x384xf32> -> vector<8x384xf32>
    %30 = arith.addf %25, %29 : vector<8x384xf32>
    %31 = vector.extract_strided_slice %1 {offsets = [0, 36], sizes = [4, 384], strides = [1, 1]} : vector<4x512xbf16> to vector<4x384xbf16>
    %c6 = arith.constant 6 : index
    %c0_20 = arith.constant 0 : index
    %c0_21 = arith.constant 0 : index
    %32 = vector.load %arg2[%c6, %c0_20, %c0_21] : memref<9x8x4xbf16, #tpu.memory_space<vmem>>, vector<1x8x4xbf16>
    %33 = vector.shape_cast %32 : vector<1x8x4xbf16> to vector<8x4xbf16>
    %cst_22 = arith.constant dense<0.000000e+00> : vector<8x384xf32>
    %34 = tpu.matmul %33, %31, %cst_22 {dimension_numbers = #tpu.dot_dimension_numbers<[1], [0], [0], [1], [0, 0, 1, 1], [], []>} : vector<8x4xbf16>, vector<4x384xbf16>, vector<8x384xf32> -> vector<8x384xf32>
    %35 = arith.addf %30, %34 : vector<8x384xf32>
    %36 = vector.extract_strided_slice %1 {offsets = [0, 37], sizes = [4, 384], strides = [1, 1]} : vector<4x512xbf16> to vector<4x384xbf16>
    %c7 = arith.constant 7 : index
    %c0_23 = arith.constant 0 : index
    %c0_24 = arith.constant 0 : index
    %37 = vector.load %arg2[%c7, %c0_23, %c0_24] : memref<9x8x4xbf16, #tpu.memory_space<vmem>>, vector<1x8x4xbf16>
    %38 = vector.shape_cast %37 : vector<1x8x4xbf16> to vector<8x4xbf16>
    %cst_25 = arith.constant dense<0.000000e+00> : vector<8x384xf32>
    %39 = tpu.matmul %38, %36, %cst_25 {dimension_numbers = #tpu.dot_dimension_numbers<[1], [0], [0], [1], [0, 0, 1, 1], [], []>} : vector<8x4xbf16>, vector<4x384xbf16>, vector<8x384xf32> -> vector<8x384xf32>
    %40 = arith.addf %35, %39 : vector<8x384xf32>
    %41 = vector.extract_strided_slice %1 {offsets = [0, 38], sizes = [4, 384], strides = [1, 1]} : vector<4x512xbf16> to vector<4x384xbf16>
    %c8 = arith.constant 8 : index
    %c0_26 = arith.constant 0 : index
    %c0_27 = arith.constant 0 : index
    %42 = vector.load %arg2[%c8, %c0_26, %c0_27] : memref<9x8x4xbf16, #tpu.memory_space<vmem>>, vector<1x8x4xbf16>
    %43 = vector.shape_cast %42 : vector<1x8x4xbf16> to vector<8x4xbf16>
    %cst_28 = arith.constant dense<0.000000e+00> : vector<8x384xf32>
    %44 = tpu.matmul %43, %41, %cst_28 {dimension_numbers = #tpu.dot_dimension_numbers<[1], [0], [0], [1], [0, 0, 1, 1], [], []>} : vector<8x4xbf16>, vector<4x384xbf16>, vector<8x384xf32> -> vector<8x384xf32>
    %45 = arith.addf %40, %44 : vector<8x384xf32>
    %c0_29 = arith.constant 0 : index
    %c0_30 = arith.constant 0 : index
    %46 = vector.load %arg3[%c0_29, %c0_30] : memref<8x1xf32, #tpu.memory_space<vmem>>, vector<8x1xf32>
    %47 = vector.broadcast %46 : vector<8x1xf32> to vector<8x384xf32>
    %48 = arith.mulf %45, %47 : vector<8x384xf32>
    %c0_31 = arith.constant 0 : index
    %c0_32 = arith.constant 0 : index
    %49 = vector.load %arg4[%c0_31, %c0_32] : memref<8x1xf32, #tpu.memory_space<vmem>>, vector<8x1xf32>
    %50 = vector.broadcast %49 : vector<8x1xf32> to vector<8x384xf32>
    %51 = arith.addf %48, %50 : vector<8x384xf32>
    %cst_33 = arith.constant 0.000000e+00 : f32
    %52 = vector.broadcast %cst_33 : f32 to vector<8x384xf32>
    %53 = arith.maximumf %51, %52 : vector<8x384xf32>
    %c0_34 = arith.constant 0 : index
    %c0_35 = arith.constant 0 : index
    %c0_36 = arith.constant 0 : index
    %54 = vector.load %arg5[%c0_34, %c0_35, %c0_36] : memref<1x8x384xf32, #tpu.memory_space<vmem>>, vector<1x8x384xf32>
    %55 = vector.shape_cast %54 : vector<1x8x384xf32> to vector<8x384xf32>
    %56 = vector.shape_cast %53 : vector<8x384xf32> to vector<1x8x384xf32>
    tpu.vector_store %arg5[%c0_34, %c0_35, %c0_36], %56 {strides = array<i32>} : memref<1x8x384xf32, #tpu.memory_space<vmem>>, vector<1x8x384xf32>,
    return
  }
  func.func @transform_0(%arg0: i32) -> (i32, i32, i32) {
    %c0_i32 = arith.constant 0 : i32
    %c0_i32_0 = arith.constant 0 : i32
    %c0_i32_1 = arith.constant 0 : i32
    return %arg0, %c0_i32, %c0_i32_0 : i32, i32, i32
  }
  func.func @transform_1(%arg0: i32) -> (i32, i32, i32) {
    %c0_i32 = arith.constant 0 : i32
    %c0_i32_0 = arith.constant 0 : i32
    %c0_i32_1 = arith.constant 0 : i32
    %c0_i32_2 = arith.constant 0 : i32
    return %c0_i32, %c0_i32_0, %c0_i32_1 : i32, i32, i32
  }
  func.func @transform_2(%arg0: i32) -> (i32, i32) {
    %c0_i32 = arith.constant 0 : i32
    %c0_i32_0 = arith.constant 0 : i32
    %c0_i32_1 = arith.constant 0 : i32
    return %c0_i32, %c0_i32_0 : i32, i32
  }
  func.func @transform_3(%arg0: i32) -> (i32, i32) {
    %c0_i32 = arith.constant 0 : i32
    %c0_i32_0 = arith.constant 0 : i32
    %c0_i32_1 = arith.constant 0 : i32
    return %c0_i32, %c0_i32_0 : i32, i32
  }
  func.func @transform_4(%arg0: i32) -> (i32, i32, i32) {
    %c0_i32 = arith.constant 0 : i32
    %c0_i32_0 = arith.constant 0 : i32
    %c0_i32_1 = arith.constant 0 : i32
    return %arg0, %c0_i32, %c0_i32_0 : i32, i32, i32
  }
}

</mosaic_0001>

<llo_original>
// kernel: basic_conv_forward.3
$region0: #{basic_conv_forward.3}
  #allocation0 [shape = 'u32[]', space=smem, size = 0x4, offset = 0x4, fixed_abs, tag = 'smem constant byte address 0x4 - core index']
  #allocation1 [shape = 'u32[144,128]{1,0:T(1,128)}', space=vmem, size = 0x12000, scoped, tag = 'internal scratch']
  %s0 = inlined_call_operand.vmem [shape: bf16[2,4,512], index: 0, kind: input, shape index: {}]
  %s1 = inlined_call_operand.vmem [shape: bf16[9,8,4], index: 1, kind: input, shape index: {}]
  %s2 = inlined_call_operand.vmem [shape: f32[8,1], index: 2, kind: input, shape index: {}]
  %s3 = inlined_call_operand.vmem [shape: f32[8,1], index: 3, kind: input, shape index: {}]
  %s4 = inlined_call_operand.vmem [shape: f32[2,8,384], index: 4, kind: output, shape index: {}]
  %s5 = sld [smem:[#allocation0]]
  $region49: #{basic_conv_forward.3} parent=0
    _
  %s7 = ssub.s32 1, %s5
  %s8 = scalar_select 0, %s7, %s5
  loop: start=0, step=1, limit=4
  $region2: #{basic_conv_forward.3} parent=0 // loop_pre_header
    _
  $region3: #{basic_conv_forward.3} parent=0 // loop_header
    %s10 = sphi 0, %s14
    %p11 = scmp.ge.s32.totalorder %s10, 4
    %s20 = sphi 0, %s22
    %s23 = sphi 0, %s20
    %s24 = sphi 0, %s23
    %s40 = sphi 0, %s24
    %s44 = sphi 0, %s44
    %s46 = sphi 0, %s44
    %s47 = sphi 0, %s46
    %s61 = sphi 0, %s47
    %s65 = sphi 0, %s65
    %s67 = sphi 0, %s65
    %s68 = sphi 0, %s67
    %s82 = sphi 0, %s68
    %s86 = sphi 0, %s86
    %s88 = sphi 0, %s86
    %s89 = sphi 0, %s88
    %s103 = sphi 0, %s89
    %s109 = sphi 0, %s111
    %s112 = sphi 0, %s109
    %s113 = sphi 0, %s112
    %s129 = sphi 0, %s113
  $region4: #{basic_conv_forward.3} parent=0 // loop_header_branch
    %13 = sbr.rel (%p11) target = $region8
  $region5: #{basic_conv_forward.3} parent=0 // loop_body
    %s15 = ssub.s32 %s10, 1
    %s16 = ssub.s32 %s10, 2
    %s17 = sadd.s32 %s10, 1
    %s18 = ssub.s32 %s10, %s17
    %p19 = scmp.eq.s32.totalorder %s18, 0
    %s21 = sadd.s32 %s20, 1
    %s22 = scalar_select %p19, %s20, %s21
    %p25 = pneg %p19
    %p26 = scmp.eq.s32.totalorder %s10, 1
    %p27 = por %p25, %p26
    %p28 = scmp.ne.s32.totalorder %s20, %s23
    %p29 = scmp.eq.s32.totalorder %s10, 0
    %p30 = por %p28, %p29
    %p31 = scmp.ne.s32.totalorder %s20, %s23
    %p32 = scmp.eq.s32.totalorder %s15, 1
    %p33 = por %p31, %p32
    %p34 = scmp.ne.s32.totalorder %s23, %s24
    %p35 = scmp.eq.s32.totalorder %s15, 0
    %p36 = por %p34, %p35
    %p37 = scmp.ne.s32.totalorder %s23, %s24
    %p38 = scmp.eq.s32.totalorder %s16, 1
    %p39 = por %p37, %p38
    %p41 = scmp.ne.s32.totalorder %s24, %s40
    %p42 = scmp.eq.s32.totalorder %s16, 0
    %p43 = por %p41, %p42
    %s45 = sadd.s32 %s44, 1
    %p48 = scmp.eq.s32.totalorder %s10, 1
    %p49 = scmp.ne.s32.totalorder %s44, %s46
    %p50 = scmp.eq.s32.totalorder %s10, 0
    %p51 = por %p49, %p50
    %p52 = scmp.ne.s32.totalorder %s44, %s46
    %p53 = scmp.eq.s32.totalorder %s15, 1
    %p54 = por %p52, %p53
    %p55 = scmp.ne.s32.totalorder %s46, %s47
    %p56 = scmp.eq.s32.totalorder %s15, 0
    %p57 = por %p55, %p56
    %p58 = scmp.ne.s32.totalorder %s46, %s47
    %p59 = scmp.eq.s32.totalorder %s16, 1
    %p60 = por %p58, %p59
    %p62 = scmp.ne.s32.totalorder %s47, %s61
    %p63 = scmp.eq.s32.totalorder %s16, 0
    %p64 = por %p62, %p63
    %s66 = sadd.s32 %s65, 1
    %p69 = scmp.eq.s32.totalorder %s10, 1
    %p70 = scmp.ne.s32.totalorder %s65, %s67
    %p71 = scmp.eq.s32.totalorder %s10, 0
    %p72 = por %p70, %p71
    %p73 = scmp.ne.s32.totalorder %s65, %s67
    %p74 = scmp.eq.s32.totalorder %s15, 1
    %p75 = por %p73, %p74
    %p76 = scmp.ne.s32.totalorder %s67, %s68
    %p77 = scmp.eq.s32.totalorder %s15, 0
    %p78 = por %p76, %p77
    %p79 = scmp.ne.s32.totalorder %s67, %s68
    %p80 = scmp.eq.s32.totalorder %s16, 1
    %p81 = por %p79, %p80
    %p83 = scmp.ne.s32.totalorder %s68, %s82
    %p84 = scmp.eq.s32.totalorder %s16, 0
    %p85 = por %p83, %p84
    %s87 = sadd.s32 %s86, 1
    %p90 = scmp.eq.s32.totalorder %s10, 1
    %p91 = scmp.ne.s32.totalorder %s86, %s88
    %p92 = scmp.eq.s32.totalorder %s10, 0
    %p93 = por %p91, %p92
    %p94 = scmp.ne.s32.totalorder %s86, %s88
    %p95 = scmp.eq.s32.totalorder %s15, 1
    %p96 = por %p94, %p95
    %p97 = scmp.ne.s32.totalorder %s88, %s89
    %p98 = scmp.eq.s32.totalorder %s15, 0
    %p99 = por %p97, %p98
    %p100 = scmp.ne.s32.totalorder %s88, %s89
    %p101 = scmp.eq.s32.totalorder %s16, 1
    %p102 = por %p100, %p101
    %p104 = scmp.ne.s32.totalorder %s89, %s103
    %p105 = scmp.eq.s32.totalorder %s16, 0
    %p106 = por %p104, %p105
    %s107 = ssub.s32 %s10, %s17
    %p108 = scmp.eq.s32.totalorder %s107, 0
    %s110 = sadd.s32 %s109, 1
    %s111 = scalar_select %p108, %s109, %s110
    %p114 = pneg %p108
    %p115 = scmp.eq.s32.totalorder %s10, 1
    %p116 = por %p114, %p115
    %p117 = scmp.ne.s32.totalorder %s109, %s112
    %p118 = scmp.eq.s32.totalorder %s10, 0
    %p119 = por %p117, %p118
    %p120 = scmp.ne.s32.totalorder %s109, %s112
    %p121 = scmp.eq.s32.totalorder %s15, 1
    %p122 = por %p120, %p121
    %p123 = scmp.ne.s32.totalorder %s112, %s113
    %p124 = scmp.eq.s32.totalorder %s15, 0
    %p125 = por %p123, %p124
    %p126 = scmp.ne.s32.totalorder %s112, %s113
    %p127 = scmp.eq.s32.totalorder %s16, 1
    %p128 = por %p126, %p127
    %p130 = scmp.ne.s32.totalorder %s113, %s129
    %p131 = scmp.eq.s32.totalorder %s16, 0
    %p132 = por %p130, %p131
    %p133 = scmp.le.s32.totalorder 1, %s10
    %p134 = scmp.lt.s32.totalorder %s10, 3
    %p135 = pnand %p133, %p134
    %p136 = pneg %p135
    // Predicated region
    $region9: #{basic_conv_forward.3} parent=5 // pred_check
      _
    $region10: #{basic_conv_forward.3} parent=5 // pred_check_branch
      %138 = sbr.rel (%p135) target = $region12
    $region11: #{basic_conv_forward.3} parent=5 // pred_region
      %s139 = ssub.s32 %s10, 1
      // Predicated region
      $region13: #{basic_conv_forward.3} parent=11 // pred_check
        %p140 = pneg %p57
      $region14: #{basic_conv_forward.3} parent=11 // pred_check_branch
        %142 = sbr.rel (%p140) target = $region16
      $region15: #{basic_conv_forward.3} parent=11 // pred_region
        _
      $region16: #{basic_conv_forward.3} parent=11 // pred_fallthru
        _
      // Predicated region
      $region17: #{basic_conv_forward.3} parent=11 // pred_check
        %p143 = pneg %p78
      $region18: #{basic_conv_forward.3} parent=11 // pred_check_branch
        %145 = sbr.rel (%p143) target = $region20
      $region19: #{basic_conv_forward.3} parent=11 // pred_region
        _
      $region20: #{basic_conv_forward.3} parent=11 // pred_fallthru
        _
      // Predicated region
      $region21: #{basic_conv_forward.3} parent=11 // pred_check
        %p146 = pneg %p99
      $region22: #{basic_conv_forward.3} parent=11 // pred_check_branch
        %148 = sbr.rel (%p146) target = $region24
      $region23: #{basic_conv_forward.3} parent=11 // pred_region
        _
      $region24: #{basic_conv_forward.3} parent=11 // pred_fallthru
        _
    $region12: #{basic_conv_forward.3} parent=5 // pred_fallthru
      _
    %p149 = scmp.lt.s32.totalorder %s10, 2
    // Predicated region
    $region25: #{basic_conv_forward.3} parent=5 // pred_check
      %p150 = pneg %p149
    $region26: #{basic_conv_forward.3} parent=5 // pred_check_branch
      %152 = sbr.rel (%p150) target = $region28
    $region27: #{basic_conv_forward.3} parent=5 // pred_region
      // Predicated region
      $region29: #{basic_conv_forward.3} parent=27 // pred_check
        %p153 = pneg %p30
      $region30: #{basic_conv_forward.3} parent=27 // pred_check_branch
        %155 = sbr.rel (%p153) target = $region32
      $region31: #{basic_conv_forward.3} parent=27 // pred_region
        %p156 = scmp.lt.s32.totalorder %s10, 1
        %s157 = scalar_select %p156, %s10, 1
        %s158 = smul.addr %s157, 4
        %s159 = smul.addr %s158, 2
        %s160 = scalar_lea.vmem %s0, %s159
      $region32: #{basic_conv_forward.3} parent=27 // pred_fallthru
        _
    $region28: #{basic_conv_forward.3} parent=5 // pred_fallthru
      _
    %p161 = scmp.le.s32.totalorder 1, %s10
    %p162 = scmp.lt.s32.totalorder %s10, 3
    %p163 = pnand %p161, %p162
    %p164 = pneg %p163
    // Predicated region
    $region33: #{basic_conv_forward.3} parent=5 // pred_check
      _
    $region34: #{basic_conv_forward.3} parent=5 // pred_check_branch
      %166 = sbr.rel (%p163) target = $region36
    $region35: #{basic_conv_forward.3} parent=5 // pred_region
      %s167 = ssub.s32 %s10, 1
      %p168 = scmp.lt.s32.totalorder %s15, 1
      %s169 = scalar_select %p168, %s15, 1
      %s170 = smul.addr %s169, 4
      %s171 = smul.addr %s170, 2
      %s172 = scalar_lea.vmem %s0, %s171
      %p173 = pneg %p36
      %p174 = pneg %p33
      %p175 = pneg %p57
      %p176 = pneg %p54
      %p177 = pneg %p78
      %p178 = pneg %p75
      %p179 = pneg %p99
      %p180 = pneg %p96
      %p181 = pneg %p125
      %p182 = pneg %p122
      %p183 = scmp.lt.s32.totalorder %s15, 1
      %s184 = scalar_select %p183, %s15, 1
      %s185 = smul.addr %s184, 3
      %s186 = smul.addr %s185, 8
      %s187 = scalar_lea.vmem %s4, %s186
      %p188 = scmp.lt.s32.totalorder %s15, 1
      %s189 = scalar_select %p188, %s15, 1
      %s190 = smul.addr %s189, 4
      %s191 = smul.addr %s190, 2
      %s192 = scalar_lea.vmem %s0, %s191
      %p193 = scmp.lt.s32.totalorder %s15, 1
      %s194 = scalar_select %p193, %s15, 1
      %s195 = smul.addr %s194, 3
      %s196 = smul.addr %s195, 8
      %s197 = scalar_lea.vmem %s4, %s196
      %v199 = vld [vmem:[%s192] sm:$0xff]
      %v200 = vld [vmem:[%s1] sm:$0xf]
      %s201 = scalar_lea.vmem %s1, 4
      %v202 = vld [vmem:[%s201] sm:$0xf]
      %v204 = vcombine.high %v199, %v199
      %v206 = vunpack.c.l.s4 1983009808
      %v207 = vunpack.c.0.s8 %v206
      %v208 = vlaneseq
      %v209 = vshrl.u32 %v208, 7
      %v210 = vsub.s32 %v207, %v209
      %v211 = vrot.slane %v199, %v210
      %v213 = vunpack.c.l.s4 1983009808
      %v214 = vunpack.c.0.s8 %v213
      %v215 = vlaneseq
      %v216 = vshrl.u32 %v215, 7
      %v217 = vsub.s32 %v214, %v216
      %v218 = vrot.slane %v204, %v217
      %v219 = vcombine.high %v211, %v211
      %v220 = vcombine.high %v218, %v218
      %221 = vrot.lane.b32.xlu0 %v211, 127
      %v222 = vpop.permute.xlu0 %221
      %223 = vrot.lane.b32.xlu0 %v219, 127
      %v224 = vpop.permute.xlu0 %223
      %225 = vrot.lane.b32.xlu0 %v218, 127
      %v226 = vpop.permute.xlu0 %225
      %227 = vrot.lane.b32.xlu0 %v220, 127
      %v228 = vpop.permute.xlu0 %227
      %vm229 = vcmask 1039360
      %v230 = vsel %vm229, %v222, %v224
      %v231 = vsel %vm229, %v224, %v226
      %v232 = vsel %vm229, %v226, %v228
      %vm233 = vcmask 31744
      %v235 = vsel %vm233, %v202, 0
      %vm237 = vcmask 1041408
      %v239 = vsel %vm237, %v230, 0
      %v242 = vsel %vm237, %v231, 0
      %v245 = vsel %vm237, %v232, 0
      %247 = vmatprep.subr.bf16.mxu0 0
      %248 = vmatpush1.bf16.msra.mxu0 0
      %249 = vmatprep.subr.bf16.mxu0 0
      %250 = vmatpush1.bf16.msra.mxu0 0
      %251 = vmatprep.subr.bf16.mxu0 0
      %252 = vmatpush1.bf16.msra.mxu0 0
      %253 = vmatprep.subr.bf16.mxu0 0
      %254 = vmatpush1.bf16.msra.mxu0 0
      %255 = vmatprep.subr.bf16.mxu0 0
      %256 = vmatpush1.bf16.msra.mxu0 0
      %257 = vmatprep.subr.bf16.mxu0 0
      %258 = vmatpush1.bf16.msra.mxu0 0
      %259 = vmatprep.subr.bf16.mxu0 0
      %260 = vmatpush1.bf16.msra.mxu0 0
      %261 = vmatprep.subr.bf16.mxu0 %v242
      %262 = vmatpush1.bf16.msra.mxu0 %v239
      %263 = vmatprep.subr.bf16.mxu0 0
      %264 = vmatpush2.bf16.msra.mxu0 0
      %265 = vmatprep.subr.bf16.mxu0 0
      %266 = vmatpush2.bf16.msra.mxu0 0
      %267 = vmatprep.subr.bf16.mxu0 0
      %268 = vmatpush2.bf16.msra.mxu0 0
      %269 = vmatprep.subr.bf16.mxu0 0
      %270 = vmatpush2.bf16.msra.mxu0 0
      %271 = vmatprep.subr.bf16.mxu0 0
      %272 = vmatpush2.bf16.msra.mxu0 0
      %273 = vmatprep.subr.bf16.mxu0 0
      %274 = vmatpush2.bf16.msra.mxu0 0
      %275 = vmatprep.subr.bf16.mxu0 0
      %276 = vmatpush2.bf16.msra.mxu0 0
      %277 = vmatprep.subr.bf16.mxu0 0
      %278 = vmatpush2.bf16.msra.mxu0 0
      %279 = vmatprep.mubr.bf16.mxu0 0
      %280 = vmatmul.mubr.bf16.gmra.mxu0 %v235
      %v281 = vpop.f32.mrf.mxu0
      %v282 = vadd.f32 0.0, %v281
      %v283 = vpop.f32.mrf.mxu0
      %v284 = vadd.f32 0.0, %v283
      %v285 = vpop.f32.mrf.mxu0
      %v286 = vpop.f32.mrf.mxu0
      %287 = vdwg.mxu0
      %288 = vmatprep.subr.bf16.mxu0 0
      %289 = vmatpush1.bf16.msra.mxu0 0
      %290 = vmatprep.subr.bf16.mxu0 0
      %291 = vmatpush1.bf16.msra.mxu0 0
      %292 = vmatprep.subr.bf16.mxu0 0
      %293 = vmatpush1.bf16.msra.mxu0 0
      %294 = vmatprep.subr.bf16.mxu0 0
      %295 = vmatpush1.bf16.msra.mxu0 0
      %296 = vmatprep.subr.bf16.mxu0 0
      %297 = vmatpush1.bf16.msra.mxu0 0
      %298 = vmatprep.subr.bf16.mxu0 0
      %299 = vmatpush1.bf16.msra.mxu0 0
      %300 = vmatprep.subr.bf16.mxu0 0
      %301 = vmatpush1.bf16.msra.mxu0 0
      %302 = vmatprep.subr.bf16.mxu0 0
      %303 = vmatpush1.bf16.msra.mxu0 %v245
      %304 = vmatprep.subr.bf16.mxu0 0
      %305 = vmatpush2.bf16.msra.mxu0 0
      %306 = vmatprep.subr.bf16.mxu0 0
      %307 = vmatpush2.bf16.msra.mxu0 0
      %308 = vmatprep.subr.bf16.mxu0 0
      %309 = vmatpush2.bf16.msra.mxu0 0
      %310 = vmatprep.subr.bf16.mxu0 0
      %311 = vmatpush2.bf16.msra.mxu0 0
      %312 = vmatprep.subr.bf16.mxu0 0
      %313 = vmatpush2.bf16.msra.mxu0 0
      %314 = vmatprep.subr.bf16.mxu0 0
      %315 = vmatpush2.bf16.msra.mxu0 0
      %316 = vmatprep.subr.bf16.mxu0 0
      %317 = vmatpush2.bf16.msra.mxu0 0
      %318 = vmatprep.subr.bf16.mxu0 0
      %319 = vmatpush2.bf16.msra.mxu0 0
      %320 = vmatprep.mubr.bf16.mxu0 0
      %321 = vmatmul.mubr.bf16.gmra.mxu0 %v235
      %v322 = vpop.f32.mrf.mxu0
      %v323 = vadd.f32 0.0, %v322
      %v324 = vpop.f32.mrf.mxu0
      %v325 = vpop.f32.mrf.mxu0
      %v326 = vpop.f32.mrf.mxu0
      %327 = vdwg.mxu0
      %v329 = vsel %vm233, %v200, 0
      %v332 = vsel %vm237, %v211, 0
      %v335 = vsel %vm237, %v219, 0
      %v338 = vsel %vm237, %v218, 0
      %340 = vmatprep.subr.bf16.mxu0 0
      %341 = vmatpush1.bf16.msra.mxu0 0
      %342 = vmatprep.subr.bf16.mxu0 0
      %343 = vmatpush1.bf16.msra.mxu0 0
      %344 = vmatprep.subr.bf16.mxu0 0
      %345 = vmatpush1.bf16.msra.mxu0 0
      %346 = vmatprep.subr.bf16.mxu0 0
      %347 = vmatpush1.bf16.msra.mxu0 0
      %348 = vmatprep.subr.bf16.mxu0 0
      %349 = vmatpush1.bf16.msra.mxu0 0
      %350 = vmatprep.subr.bf16.mxu0 0
      %351 = vmatpush1.bf16.msra.mxu0 0
      %352 = vmatprep.subr.bf16.mxu0 0
      %353 = vmatpush1.bf16.msra.mxu0 0
      %354 = vmatprep.subr.bf16.mxu0 %v335
      %355 = vmatpush1.bf16.msra.mxu0 %v332
      %356 = vmatprep.subr.bf16.mxu0 0
      %357 = vmatpush2.bf16.msra.mxu0 0
      %358 = vmatprep.subr.bf16.mxu0 0
      %359 = vmatpush2.bf16.msra.mxu0 0
      %360 = vmatprep.subr.bf16.mxu0 0
      %361 = vmatpush2.bf16.msra.mxu0 0
      %362 = vmatprep.subr.bf16.mxu0 0
      %363 = vmatpush2.bf16.msra.mxu0 0
      %364 = vmatprep.subr.bf16.mxu0 0
      %365 = vmatpush2.bf16.msra.mxu0 0
      %366 = vmatprep.subr.bf16.mxu0 0
      %367 = vmatpush2.bf16.msra.mxu0 0
      %368 = vmatprep.subr.bf16.mxu0 0
      %369 = vmatpush2.bf16.msra.mxu0 0
      %370 = vmatprep.subr.bf16.mxu0 0
      %371 = vmatpush2.bf16.msra.mxu0 0
      %372 = vmatprep.mubr.bf16.mxu0 0
      %373 = vmatmul.mubr.bf16.gmra.mxu0 %v329
      %v374 = vpop.f32.mrf.mxu0
      %v375 = vadd.f32 %v282, %v374
      %v376 = vpop.f32.mrf.mxu0
      %v377 = vadd.f32 %v284, %v376
      %v378 = vpop.f32.mrf.mxu0
      %v379 = vpop.f32.mrf.mxu0
      %380 = vdwg.mxu0
      %381 = vmatprep.subr.bf16.mxu0 0
      %382 = vmatpush1.bf16.msra.mxu0 0
      %383 = vmatprep.subr.bf16.mxu0 0
      %384 = vmatpush1.bf16.msra.mxu0 0
      %385 = vmatprep.subr.bf16.mxu0 0
      %386 = vmatpush1.bf16.msra.mxu0 0
      %387 = vmatprep.subr.bf16.mxu0 0
      %388 = vmatpush1.bf16.msra.mxu0 0
      %389 = vmatprep.subr.bf16.mxu0 0
      %390 = vmatpush1.bf16.msra.mxu0 0
      %391 = vmatprep.subr.bf16.mxu0 0
      %392 = vmatpush1.bf16.msra.mxu0 0
      %393 = vmatprep.subr.bf16.mxu0 0
      %394 = vmatpush1.bf16.msra.mxu0 0
      %395 = vmatprep.subr.bf16.mxu0 0
      %396 = vmatpush1.bf16.msra.mxu0 %v338
      %397 = vmatprep.subr.bf16.mxu0 0
      %398 = vmatpush2.bf16.msra.mxu0 0
      %399 = vmatprep.subr.bf16.mxu0 0
      %400 = vmatpush2.bf16.msra.mxu0 0
      %401 = vmatprep.subr.bf16.mxu0 0
      %402 = vmatpush2.bf16.msra.mxu0 0
      %403 = vmatprep.subr.bf16.mxu0 0
      %404 = vmatpush2.bf16.msra.mxu0 0
      %405 = vmatprep.subr.bf16.mxu0 0
      %406 = vmatpush2.bf16.msra.mxu0 0
      %407 = vmatprep.subr.bf16.mxu0 0
      %408 = vmatpush2.bf16.msra.mxu0 0
      %409 = vmatprep.subr.bf16.mxu0 0
      %410 = vmatpush2.bf16.msra.mxu0 0
      %411 = vmatprep.subr.bf16.mxu0 0
      %412 = vmatpush2.bf16.msra.mxu0 0
      %413 = vmatprep.mubr.bf16.mxu0 0
      %414 = vmatmul.mubr.bf16.gmra.mxu0 %v329
      %v415 = vpop.f32.mrf.mxu0
      %v416 = vadd.f32 %v323, %v415
      %v417 = vpop.f32.mrf.mxu0
      %v418 = vpop.f32.mrf.mxu0
      %v419 = vpop.f32.mrf.mxu0
      %420 = vdwg.mxu0
      %s421 = scalar_lea.vmem %s1, 8
      %v422 = vld [vmem:[%s421] sm:$0xf]
      %423 = vrot.lane.b32.xlu0 %v211, 126
      %v424 = vpop.permute.xlu0 %423
      %425 = vrot.lane.b32.xlu0 %v219, 126
      %v426 = vpop.permute.xlu0 %425
      %427 = vrot.lane.b32.xlu0 %v218, 126
      %v428 = vpop.permute.xlu0 %427
      %429 = vrot.lane.b32.xlu0 %v220, 126
      %v430 = vpop.permute.xlu0 %429
      %vm431 = vcmask 1031168
      %v432 = vsel %vm431, %v424, %v426
      %v433 = vsel %vm431, %v426, %v428
      %v434 = vsel %vm431, %v428, %v430
      %v436 = vsel %vm233, %v422, 0
      %v439 = vsel %vm237, %v432, 0
      %v442 = vsel %vm237, %v433, 0
      %v445 = vsel %vm237, %v434, 0
      %447 = vmatprep.subr.bf16.mxu0 0
      %448 = vmatpush1.bf16.msra.mxu0 0
      %449 = vmatprep.subr.bf16.mxu0 0
      %450 = vmatpush1.bf16.msra.mxu0 0
      %451 = vmatprep.subr.bf16.mxu0 0
      %452 = vmatpush1.bf16.msra.mxu0 0
      %453 = vmatprep.subr.bf16.mxu0 0
      %454 = vmatpush1.bf16.msra.mxu0 0
      %455 = vmatprep.subr.bf16.mxu0 0
      %456 = vmatpush1.bf16.msra.mxu0 0
      %457 = vmatprep.subr.bf16.mxu0 0
      %458 = vmatpush1.bf16.msra.mxu0 0
      %459 = vmatprep.subr.bf16.mxu0 0
      %460 = vmatpush1.bf16.msra.mxu0 0
      %461 = vmatprep.subr.bf16.mxu0 %v442
      %462 = vmatpush1.bf16.msra.mxu0 %v439
      %463 = vmatprep.subr.bf16.mxu0 0
      %464 = vmatpush2.bf16.msra.mxu0 0
      %465 = vmatprep.subr.bf16.mxu0 0
      %466 = vmatpush2.bf16.msra.mxu0 0
      %467 = vmatprep.subr.bf16.mxu0 0
      %468 = vmatpush2.bf16.msra.mxu0 0
      %469 = vmatprep.subr.bf16.mxu0 0
      %470 = vmatpush2.bf16.msra.mxu0 0
      %471 = vmatprep.subr.bf16.mxu0 0
      %472 = vmatpush2.bf16.msra.mxu0 0
      %473 = vmatprep.subr.bf16.mxu0 0
      %474 = vmatpush2.bf16.msra.mxu0 0
      %475 = vmatprep.subr.bf16.mxu0 0
      %476 = vmatpush2.bf16.msra.mxu0 0
      %477 = vmatprep.subr.bf16.mxu0 0
      %478 = vmatpush2.bf16.msra.mxu0 0
      %479 = vmatprep.mubr.bf16.mxu0 0
      %480 = vmatmul.mubr.bf16.gmra.mxu0 %v436
      %v481 = vpop.f32.mrf.mxu0
      %v482 = vadd.f32 0.0, %v481
      %v483 = vpop.f32.mrf.mxu0
      %v484 = vadd.f32 0.0, %v483
      %v485 = vpop.f32.mrf.mxu0
      %v486 = vpop.f32.mrf.mxu0
      %487 = vdwg.mxu0
      %488 = vmatprep.subr.bf16.mxu0 0
      %489 = vmatpush1.bf16.msra.mxu0 0
      %490 = vmatprep.subr.bf16.mxu0 0
      %491 = vmatpush1.bf16.msra.mxu0 0
      %492 = vmatprep.subr.bf16.mxu0 0
      %493 = vmatpush1.bf16.msra.mxu0 0
      %494 = vmatprep.subr.bf16.mxu0 0
      %495 = vmatpush1.bf16.msra.mxu0 0
      %496 = vmatprep.subr.bf16.mxu0 0
      %497 = vmatpush1.bf16.msra.mxu0 0
      %498 = vmatprep.subr.bf16.mxu0 0
      %499 = vmatpush1.bf16.msra.mxu0 0
      %500 = vmatprep.subr.bf16.mxu0 0
      %501 = vmatpush1.bf16.msra.mxu0 0
      %502 = vmatprep.subr.bf16.mxu0 0
      %503 = vmatpush1.bf16.msra.mxu0 %v445
      %504 = vmatprep.subr.bf16.mxu0 0
      %505 = vmatpush2.bf16.msra.mxu0 0
      %506 = vmatprep.subr.bf16.mxu0 0
      %507 = vmatpush2.bf16.msra.mxu0 0
      %508 = vmatprep.subr.bf16.mxu0 0
      %509 = vmatpush2.bf16.msra.mxu0 0
      %510 = vmatprep.subr.bf16.mxu0 0
      %511 = vmatpush2.bf16.msra.mxu0 0
      %512 = vmatprep.subr.bf16.mxu0 0
      %513 = vmatpush2.bf16.msra.mxu0 0
      %514 = vmatprep.subr.bf16.mxu0 0
      %515 = vmatpush2.bf16.msra.mxu0 0
      %516 = vmatprep.subr.bf16.mxu0 0
      %517 = vmatpush2.bf16.msra.mxu0 0
      %518 = vmatprep.subr.bf16.mxu0 0
      %519 = vmatpush2.bf16.msra.mxu0 0
      %520 = vmatprep.mubr.bf16.mxu0 0
      %521 = vmatmul.mubr.bf16.gmra.mxu0 %v436
      %v522 = vpop.f32.mrf.mxu0
      %v523 = vadd.f32 0.0, %v522
      %v524 = vpop.f32.mrf.mxu0
      %v525 = vpop.f32.mrf.mxu0
      %v526 = vpop.f32.mrf.mxu0
      %527 = vdwg.mxu0
      %v528 = vadd.f32 %v375, %v482
      %v529 = vadd.f32 %v377, %v484
      %v530 = vadd.f32 %v416, %v523
      %s531 = scalar_lea.vmem %s1, 12
      %v532 = vld [vmem:[%s531] sm:$0xf]
      %533 = vrot.lane.b32.xlu0 %v211, 110
      %v534 = vpop.permute.xlu0 %533
      %535 = vrot.lane.b32.xlu0 %v219, 110
      %v536 = vpop.permute.xlu0 %535
      %537 = vrot.lane.b32.xlu0 %v218, 110
      %v538 = vpop.permute.xlu0 %537
      %539 = vrot.lane.b32.xlu0 %v220, 110
      %v540 = vpop.permute.xlu0 %539
      %vm541 = vcmask 900096
      %v542 = vsel %vm541, %v534, %v536
      %v543 = vsel %vm541, %v536, %v538
      %v544 = vsel %vm541, %v538, %v540
      %v546 = vsel %vm233, %v532, 0
      %v549 = vsel %vm237, %v542, 0
      %v552 = vsel %vm237, %v543, 0
      %v555 = vsel %vm237, %v544, 0
      %557 = vmatprep.subr.bf16.mxu0 0
      %558 = vmatpush1.bf16.msra.mxu0 0
      %559 = vmatprep.subr.bf16.mxu0 0
      %560 = vmatpush1.bf16.msra.mxu0 0
      %561 = vmatprep.subr.bf16.mxu0 0
      %562 = vmatpush1.bf16.msra.mxu0 0
      %563 = vmatprep.subr.bf16.mxu0 0
      %564 = vmatpush1.bf16.msra.mxu0 0
      %565 = vmatprep.subr.bf16.mxu0 0
      %566 = vmatpush1.bf16.msra.mxu0 0
      %567 = vmatprep.subr.bf16.mxu0 0
      %568 = vmatpush1.bf16.msra.mxu0 0
      %569 = vmatprep.subr.bf16.mxu0 0
      %570 = vmatpush1.bf16.msra.mxu0 0
      %571 = vmatprep.subr.bf16.mxu0 %v552
      %572 = vmatpush1.bf16.msra.mxu0 %v549
      %573 = vmatprep.subr.bf16.mxu0 0
      %574 = vmatpush2.bf16.msra.mxu0 0
      %575 = vmatprep.subr.bf16.mxu0 0
      %576 = vmatpush2.bf16.msra.mxu0 0
      %577 = vmatprep.subr.bf16.mxu0 0
      %578 = vmatpush2.bf16.msra.mxu0 0
      %579 = vmatprep.subr.bf16.mxu0 0
      %580 = vmatpush2.bf16.msra.mxu0 0
      %581 = vmatprep.subr.bf16.mxu0 0
      %582 = vmatpush2.bf16.msra.mxu0 0
      %583 = vmatprep.subr.bf16.mxu0 0
      %584 = vmatpush2.bf16.msra.mxu0 0
      %585 = vmatprep.subr.bf16.mxu0 0
      %586 = vmatpush2.bf16.msra.mxu0 0
      %587 = vmatprep.subr.bf16.mxu0 0
      %588 = vmatpush2.bf16.msra.mxu0 0
      %589 = vmatprep.mubr.bf16.mxu0 0
      %590 = vmatmul.mubr.bf16.gmra.mxu0 %v546
      %v591 = vpop.f32.mrf.mxu0
      %v592 = vadd.f32 0.0, %v591
      %v593 = vpop.f32.mrf.mxu0
      %v594 = vadd.f32 0.0, %v593
      %v595 = vpop.f32.mrf.mxu0
      %v596 = vpop.f32.mrf.mxu0
      %597 = vdwg.mxu0
      %598 = vmatprep.subr.bf16.mxu0 0
      %599 = vmatpush1.bf16.msra.mxu0 0
      %600 = vmatprep.subr.bf16.mxu0 0
      %601 = vmatpush1.bf16.msra.mxu0 0
      %602 = vmatprep.subr.bf16.mxu0 0
      %603 = vmatpush1.bf16.msra.mxu0 0
      %604 = vmatprep.subr.bf16.mxu0 0
      %605 = vmatpush1.bf16.msra.mxu0 0
      %606 = vmatprep.subr.bf16.mxu0 0
      %607 = vmatpush1.bf16.msra.mxu0 0
      %608 = vmatprep.subr.bf16.mxu0 0
      %609 = vmatpush1.bf16.msra.mxu0 0
      %610 = vmatprep.subr.bf16.mxu0 0
      %611 = vmatpush1.bf16.msra.mxu0 0
      %612 = vmatprep.subr.bf16.mxu0 0
      %613 = vmatpush1.bf16.msra.mxu0 %v555
      %614 = vmatprep.subr.bf16.mxu0 0
      %615 = vmatpush2.bf16.msra.mxu0 0
      %616 = vmatprep.subr.bf16.mxu0 0
      %617 = vmatpush2.bf16.msra.mxu0 0
      %618 = vmatprep.subr.bf16.mxu0 0
      %619 = vmatpush2.bf16.msra.mxu0 0
      %620 = vmatprep.subr.bf16.mxu0 0
      %621 = vmatpush2.bf16.msra.mxu0 0
      %622 = vmatprep.subr.bf16.mxu0 0
      %623 = vmatpush2.bf16.msra.mxu0 0
      %624 = vmatprep.subr.bf16.mxu0 0
      %625 = vmatpush2.bf16.msra.mxu0 0
      %626 = vmatprep.subr.bf16.mxu0 0
      %627 = vmatpush2.bf16.msra.mxu0 0
      %628 = vmatprep.subr.bf16.mxu0 0
      %629 = vmatpush2.bf16.msra.mxu0 0
      %630 = vmatprep.mubr.bf16.mxu0 0
      %631 = vmatmul.mubr.bf16.gmra.mxu0 %v546
      %v632 = vpop.f32.mrf.mxu0
      %v633 = vadd.f32 0.0, %v632
      %v634 = vpop.f32.mrf.mxu0
      %v635 = vpop.f32.mrf.mxu0
      %v636 = vpop.f32.mrf.mxu0
      %637 = vdwg.mxu0
      %v638 = vadd.f32 %v528, %v592
      %v639 = vadd.f32 %v529, %v594
      %v640 = vadd.f32 %v530, %v633
      %s641 = scalar_lea.vmem %s1, 16
      %v642 = vld [vmem:[%s641] sm:$0xf]
      %643 = vrot.lane.b32.xlu0 %v211, 109
      %v644 = vpop.permute.xlu0 %643
      %645 = vrot.lane.b32.xlu0 %v219, 109
      %v646 = vpop.permute.xlu0 %645
      %647 = vrot.lane.b32.xlu0 %v218, 109
      %v648 = vpop.permute.xlu0 %647
      %649 = vrot.lane.b32.xlu0 %v220, 109
      %v650 = vpop.permute.xlu0 %649
      %vm651 = vcmask 891904
      %v652 = vsel %vm651, %v644, %v646
      %v653 = vsel %vm651, %v646, %v648
      %v654 = vsel %vm651, %v648, %v650
      %v656 = vsel %vm233, %v642, 0
      %v659 = vsel %vm237, %v652, 0
      %v662 = vsel %vm237, %v653, 0
      %v665 = vsel %vm237, %v654, 0
      %667 = vmatprep.subr.bf16.mxu0 0
      %668 = vmatpush1.bf16.msra.mxu0 0
      %669 = vmatprep.subr.bf16.mxu0 0
      %670 = vmatpush1.bf16.msra.mxu0 0
      %671 = vmatprep.subr.bf16.mxu0 0
      %672 = vmatpush1.bf16.msra.mxu0 0
      %673 = vmatprep.subr.bf16.mxu0 0
      %674 = vmatpush1.bf16.msra.mxu0 0
      %675 = vmatprep.subr.bf16.mxu0 0
      %676 = vmatpush1.bf16.msra.mxu0 0
      %677 = vmatprep.subr.bf16.mxu0 0
      %678 = vmatpush1.bf16.msra.mxu0 0
      %679 = vmatprep.subr.bf16.mxu0 0
      %680 = vmatpush1.bf16.msra.mxu0 0
      %681 = vmatprep.subr.bf16.mxu0 %v662
      %682 = vmatpush1.bf16.msra.mxu0 %v659
      %683 = vmatprep.subr.bf16.mxu0 0
      %684 = vmatpush2.bf16.msra.mxu0 0
      %685 = vmatprep.subr.bf16.mxu0 0
      %686 = vmatpush2.bf16.msra.mxu0 0
      %687 = vmatprep.subr.bf16.mxu0 0
      %688 = vmatpush2.bf16.msra.mxu0 0
      %689 = vmatprep.subr.bf16.mxu0 0
      %690 = vmatpush2.bf16.msra.mxu0 0
      %691 = vmatprep.subr.bf16.mxu0 0
      %692 = vmatpush2.bf16.msra.mxu0 0
      %693 = vmatprep.subr.bf16.mxu0 0
      %694 = vmatpush2.bf16.msra.mxu0 0
      %695 = vmatprep.subr.bf16.mxu0 0
      %696 = vmatpush2.bf16.msra.mxu0 0
      %697 = vmatprep.subr.bf16.mxu0 0
      %698 = vmatpush2.bf16.msra.mxu0 0
      %699 = vmatprep.mubr.bf16.mxu0 0
      %700 = vmatmul.mubr.bf16.gmra.mxu0 %v656
      %v701 = vpop.f32.mrf.mxu0
      %v702 = vadd.f32 0.0, %v701
      %v703 = vpop.f32.mrf.mxu0
      %v704 = vadd.f32 0.0, %v703
      %v705 = vpop.f32.mrf.mxu0
      %v706 = vpop.f32.mrf.mxu0
      %707 = vdwg.mxu0
      %708 = vmatprep.subr.bf16.mxu0 0
      %709 = vmatpush1.bf16.msra.mxu0 0
      %710 = vmatprep.subr.bf16.mxu0 0
      %711 = vmatpush1.bf16.msra.mxu0 0
      %712 = vmatprep.subr.bf16.mxu0 0
      %713 = vmatpush1.bf16.msra.mxu0 0
      %714 = vmatprep.subr.bf16.mxu0 0
      %715 = vmatpush1.bf16.msra.mxu0 0
      %716 = vmatprep.subr.bf16.mxu0 0
      %717 = vmatpush1.bf16.msra.mxu0 0
      %718 = vmatprep.subr.bf16.mxu0 0
      %719 = vmatpush1.bf16.msra.mxu0 0
      %720 = vmatprep.subr.bf16.mxu0 0
      %721 = vmatpush1.bf16.msra.mxu0 0
      %722 = vmatprep.subr.bf16.mxu0 0
      %723 = vmatpush1.bf16.msra.mxu0 %v665
      %724 = vmatprep.subr.bf16.mxu0 0
      %725 = vmatpush2.bf16.msra.mxu0 0
      %726 = vmatprep.subr.bf16.mxu0 0
      %727 = vmatpush2.bf16.msra.mxu0 0
      %728 = vmatprep.subr.bf16.mxu0 0
      %729 = vmatpush2.bf16.msra.mxu0 0
      %730 = vmatprep.subr.bf16.mxu0 0
      %731 = vmatpush2.bf16.msra.mxu0 0
      %732 = vmatprep.subr.bf16.mxu0 0
      %733 = vmatpush2.bf16.msra.mxu0 0
      %734 = vmatprep.subr.bf16.mxu0 0
      %735 = vmatpush2.bf16.msra.mxu0 0
      %736 = vmatprep.subr.bf16.mxu0 0
      %737 = vmatpush2.bf16.msra.mxu0 0
      %738 = vmatprep.subr.bf16.mxu0 0
      %739 = vmatpush2.bf16.msra.mxu0 0
      %740 = vmatprep.mubr.bf16.mxu0 0
      %741 = vmatmul.mubr.bf16.gmra.mxu0 %v656
      %v742 = vpop.f32.mrf.mxu0
      %v743 = vadd.f32 0.0, %v742
      %v744 = vpop.f32.mrf.mxu0
      %v745 = vpop.f32.mrf.mxu0
      %v746 = vpop.f32.mrf.mxu0
      %747 = vdwg.mxu0
      %v748 = vadd.f32 %v638, %v702
      %v749 = vadd.f32 %v639, %v704
      %v750 = vadd.f32 %v640, %v743
      %s751 = scalar_lea.vmem %s1, 20
      %v752 = vld [vmem:[%s751] sm:$0xf]
      %753 = vrot.lane.b32.xlu0 %v211, 108
      %v754 = vpop.permute.xlu0 %753
      %755 = vrot.lane.b32.xlu0 %v219, 108
      %v756 = vpop.permute.xlu0 %755
      %757 = vrot.lane.b32.xlu0 %v218, 108
      %v758 = vpop.permute.xlu0 %757
      %759 = vrot.lane.b32.xlu0 %v220, 108
      %v760 = vpop.permute.xlu0 %759
      %vm761 = vcmask 883712
      %v762 = vsel %vm761, %v754, %v756
      %v763 = vsel %vm761, %v756, %v758
      %v764 = vsel %vm761, %v758, %v760
      %v766 = vsel %vm233, %v752, 0
      %v769 = vsel %vm237, %v762, 0
      %v772 = vsel %vm237, %v763, 0
      %v775 = vsel %vm237, %v764, 0
      %777 = vmatprep.subr.bf16.mxu0 0
      %778 = vmatpush1.bf16.msra.mxu0 0
      %779 = vmatprep.subr.bf16.mxu0 0
      %780 = vmatpush1.bf16.msra.mxu0 0
      %781 = vmatprep.subr.bf16.mxu0 0
      %782 = vmatpush1.bf16.msra.mxu0 0
      %783 = vmatprep.subr.bf16.mxu0 0
      %784 = vmatpush1.bf16.msra.mxu0 0
      %785 = vmatprep.subr.bf16.mxu0 0
      %786 = vmatpush1.bf16.msra.mxu0 0
      %787 = vmatprep.subr.bf16.mxu0 0
      %788 = vmatpush1.bf16.msra.mxu0 0
      %789 = vmatprep.subr.bf16.mxu0 0
      %790 = vmatpush1.bf16.msra.mxu0 0
      %791 = vmatprep.subr.bf16.mxu0 %v772
      %792 = vmatpush1.bf16.msra.mxu0 %v769
      %793 = vmatprep.subr.bf16.mxu0 0
      %794 = vmatpush2.bf16.msra.mxu0 0
      %795 = vmatprep.subr.bf16.mxu0 0
      %796 = vmatpush2.bf16.msra.mxu0 0
      %797 = vmatprep.subr.bf16.mxu0 0
      %798 = vmatpush2.bf16.msra.mxu0 0
      %799 = vmatprep.subr.bf16.mxu0 0
      %800 = vmatpush2.bf16.msra.mxu0 0
      %801 = vmatprep.subr.bf16.mxu0 0
      %802 = vmatpush2.bf16.msra.mxu0 0
      %803 = vmatprep.subr.bf16.mxu0 0
      %804 = vmatpush2.bf16.msra.mxu0 0
      %805 = vmatprep.subr.bf16.mxu0 0
      %806 = vmatpush2.bf16.msra.mxu0 0
      %807 = vmatprep.subr.bf16.mxu0 0
      %808 = vmatpush2.bf16.msra.mxu0 0
      %809 = vmatprep.mubr.bf16.mxu0 0
      %810 = vmatmul.mubr.bf16.gmra.mxu0 %v766
      %v811 = vpop.f32.mrf.mxu0
      %v812 = vadd.f32 0.0, %v811
      %v813 = vpop.f32.mrf.mxu0
      %v814 = vadd.f32 0.0, %v813
      %v815 = vpop.f32.mrf.mxu0
      %v816 = vpop.f32.mrf.mxu0
      %817 = vdwg.mxu0
      %818 = vmatprep.subr.bf16.mxu0 0
      %819 = vmatpush1.bf16.msra.mxu0 0
      %820 = vmatprep.subr.bf16.mxu0 0
      %821 = vmatpush1.bf16.msra.mxu0 0
      %822 = vmatprep.subr.bf16.mxu0 0
      %823 = vmatpush1.bf16.msra.mxu0 0
      %824 = vmatprep.subr.bf16.mxu0 0
      %825 = vmatpush1.bf16.msra.mxu0 0
      %826 = vmatprep.subr.bf16.mxu0 0
      %827 = vmatpush1.bf16.msra.mxu0 0
      %828 = vmatprep.subr.bf16.mxu0 0
      %829 = vmatpush1.bf16.msra.mxu0 0
      %830 = vmatprep.subr.bf16.mxu0 0
      %831 = vmatpush1.bf16.msra.mxu0 0
      %832 = vmatprep.subr.bf16.mxu0 0
      %833 = vmatpush1.bf16.msra.mxu0 %v775
      %834 = vmatprep.subr.bf16.mxu0 0
      %835 = vmatpush2.bf16.msra.mxu0 0
      %836 = vmatprep.subr.bf16.mxu0 0
      %837 = vmatpush2.bf16.msra.mxu0 0
      %838 = vmatprep.subr.bf16.mxu0 0
      %839 = vmatpush2.bf16.msra.mxu0 0
      %840 = vmatprep.subr.bf16.mxu0 0
      %841 = vmatpush2.bf16.msra.mxu0 0
      %842 = vmatprep.subr.bf16.mxu0 0
      %843 = vmatpush2.bf16.msra.mxu0 0
      %844 = vmatprep.subr.bf16.mxu0 0
      %845 = vmatpush2.bf16.msra.mxu0 0
      %846 = vmatprep.subr.bf16.mxu0 0
      %847 = vmatpush2.bf16.msra.mxu0 0
      %848 = vmatprep.subr.bf16.mxu0 0
      %849 = vmatpush2.bf16.msra.mxu0 0
      %850 = vmatprep.mubr.bf16.mxu0 0
      %851 = vmatmul.mubr.bf16.gmra.mxu0 %v766
      %v852 = vpop.f32.mrf.mxu0
      %v853 = vadd.f32 0.0, %v852
      %v854 = vpop.f32.mrf.mxu0
      %v855 = vpop.f32.mrf.mxu0
      %v856 = vpop.f32.mrf.mxu0
      %857 = vdwg.mxu0
      %v858 = vadd.f32 %v748, %v812
      %v859 = vadd.f32 %v749, %v814
      %v860 = vadd.f32 %v750, %v853
      %s861 = scalar_lea.vmem %s1, 24
      %v862 = vld [vmem:[%s861] sm:$0xf]
      %863 = vrot.lane.b32.xlu0 %v211, 92
      %v864 = vpop.permute.xlu0 %863
      %865 = vrot.lane.b32.xlu0 %v219, 92
      %v866 = vpop.permute.xlu0 %865
      %867 = vrot.lane.b32.xlu0 %v218, 92
      %v868 = vpop.permute.xlu0 %867
      %869 = vrot.lane.b32.xlu0 %v220, 92
      %v870 = vpop.permute.xlu0 %869
      %vm871 = vcmask 752640
      %v872 = vsel %vm871, %v864, %v866
      %v873 = vsel %vm871, %v866, %v868
      %v874 = vsel %vm871, %v868, %v870
      %v876 = vsel %vm233, %v862, 0
      %v879 = vsel %vm237, %v872, 0
      %v882 = vsel %vm237, %v873, 0
      %v885 = vsel %vm237, %v874, 0
      %887 = vmatprep.subr.bf16.mxu0 0
      %888 = vmatpush1.bf16.msra.mxu0 0
      %889 = vmatprep.subr.bf16.mxu0 0
      %890 = vmatpush1.bf16.msra.mxu0 0
      %891 = vmatprep.subr.bf16.mxu0 0
      %892 = vmatpush1.bf16.msra.mxu0 0
      %893 = vmatprep.subr.bf16.mxu0 0
      %894 = vmatpush1.bf16.msra.mxu0 0
      %895 = vmatprep.subr.bf16.mxu0 0
      %896 = vmatpush1.bf16.msra.mxu0 0
      %897 = vmatprep.subr.bf16.mxu0 0
      %898 = vmatpush1.bf16.msra.mxu0 0
      %899 = vmatprep.subr.bf16.mxu0 0
      %900 = vmatpush1.bf16.msra.mxu0 0
      %901 = vmatprep.subr.bf16.mxu0 %v882
      %902 = vmatpush1.bf16.msra.mxu0 %v879
      %903 = vmatprep.subr.bf16.mxu0 0
      %904 = vmatpush2.bf16.msra.mxu0 0
      %905 = vmatprep.subr.bf16.mxu0 0
      %906 = vmatpush2.bf16.msra.mxu0 0
      %907 = vmatprep.subr.bf16.mxu0 0
      %908 = vmatpush2.bf16.msra.mxu0 0
      %909 = vmatprep.subr.bf16.mxu0 0
      %910 = vmatpush2.bf16.msra.mxu0 0
      %911 = vmatprep.subr.bf16.mxu0 0
      %912 = vmatpush2.bf16.msra.mxu0 0
      %913 = vmatprep.subr.bf16.mxu0 0
      %914 = vmatpush2.bf16.msra.mxu0 0
      %915 = vmatprep.subr.bf16.mxu0 0
      %916 = vmatpush2.bf16.msra.mxu0 0
      %917 = vmatprep.subr.bf16.mxu0 0
      %918 = vmatpush2.bf16.msra.mxu0 0
      %919 = vmatprep.mubr.bf16.mxu0 0
      %920 = vmatmul.mubr.bf16.gmra.mxu0 %v876
      %v921 = vpop.f32.mrf.mxu0
      %v922 = vadd.f32 0.0, %v921
      %v923 = vpop.f32.mrf.mxu0
      %v924 = vadd.f32 0.0, %v923
      %v925 = vpop.f32.mrf.mxu0
      %v926 = vpop.f32.mrf.mxu0
      %927 = vdwg.mxu0
      %928 = vmatprep.subr.bf16.mxu0 0
      %929 = vmatpush1.bf16.msra.mxu0 0
      %930 = vmatprep.subr.bf16.mxu0 0
      %931 = vmatpush1.bf16.msra.mxu0 0
      %932 = vmatprep.subr.bf16.mxu0 0
      %933 = vmatpush1.bf16.msra.mxu0 0
      %934 = vmatprep.subr.bf16.mxu0 0
      %935 = vmatpush1.bf16.msra.mxu0 0
      %936 = vmatprep.subr.bf16.mxu0 0
      %937 = vmatpush1.bf16.msra.mxu0 0
      %938 = vmatprep.subr.bf16.mxu0 0
      %939 = vmatpush1.bf16.msra.mxu0 0
      %940 = vmatprep.subr.bf16.mxu0 0
      %941 = vmatpush1.bf16.msra.mxu0 0
      %942 = vmatprep.subr.bf16.mxu0 0
      %943 = vmatpush1.bf16.msra.mxu0 %v885
      %944 = vmatprep.subr.bf16.mxu0 0
      %945 = vmatpush2.bf16.msra.mxu0 0
      %946 = vmatprep.subr.bf16.mxu0 0
      %947 = vmatpush2.bf16.msra.mxu0 0
      %948 = vmatprep.subr.bf16.mxu0 0
      %949 = vmatpush2.bf16.msra.mxu0 0
      %950 = vmatprep.subr.bf16.mxu0 0
      %951 = vmatpush2.bf16.msra.mxu0 0
      %952 = vmatprep.subr.bf16.mxu0 0
      %953 = vmatpush2.bf16.msra.mxu0 0
      %954 = vmatprep.subr.bf16.mxu0 0
      %955 = vmatpush2.bf16.msra.mxu0 0
      %956 = vmatprep.subr.bf16.mxu0 0
      %957 = vmatpush2.bf16.msra.mxu0 0
      %958 = vmatprep.subr.bf16.mxu0 0
      %959 = vmatpush2.bf16.msra.mxu0 0
      %960 = vmatprep.mubr.bf16.mxu0 0
      %961 = vmatmul.mubr.bf16.gmra.mxu0 %v876
      %v962 = vpop.f32.mrf.mxu0
      %v963 = vadd.f32 0.0, %v962
      %v964 = vpop.f32.mrf.mxu0
      %v965 = vpop.f32.mrf.mxu0
      %v966 = vpop.f32.mrf.mxu0
      %967 = vdwg.mxu0
      %v968 = vadd.f32 %v858, %v922
      %v969 = vadd.f32 %v859, %v924
      %v970 = vadd.f32 %v860, %v963
      %s971 = scalar_lea.vmem %s1, 28
      %v972 = vld [vmem:[%s971] sm:$0xf]
      %973 = vrot.lane.b32.xlu0 %v211, 91
      %v974 = vpop.permute.xlu0 %973
      %975 = vrot.lane.b32.xlu0 %v219, 91
      %v976 = vpop.permute.xlu0 %975
      %977 = vrot.lane.b32.xlu0 %v218, 91
      %v978 = vpop.permute.xlu0 %977
      %979 = vrot.lane.b32.xlu0 %v220, 91
      %v980 = vpop.permute.xlu0 %979
      %vm981 = vcmask 744448
      %v982 = vsel %vm981, %v974, %v976
      %v983 = vsel %vm981, %v976, %v978
      %v984 = vsel %vm981, %v978, %v980
      %v986 = vsel %vm233, %v972, 0
      %v989 = vsel %vm237, %v982, 0
      %v992 = vsel %vm237, %v983, 0
      %v995 = vsel %vm237, %v984, 0
      %997 = vmatprep.subr.bf16.mxu0 0
      %998 = vmatpush1.bf16.msra.mxu0 0
      %999 = vmatprep.subr.bf16.mxu0 0
      %1000 = vmatpush1.bf16.msra.mxu0 0
      %1001 = vmatprep.subr.bf16.mxu0 0
      %1002 = vmatpush1.bf16.msra.mxu0 0
      %1003 = vmatprep.subr.bf16.mxu0 0
      %1004 = vmatpush1.bf16.msra.mxu0 0
      %1005 = vmatprep.subr.bf16.mxu0 0
      %1006 = vmatpush1.bf16.msra.mxu0 0
      %1007 = vmatprep.subr.bf16.mxu0 0
      %1008 = vmatpush1.bf16.msra.mxu0 0
      %1009 = vmatprep.subr.bf16.mxu0 0
      %1010 = vmatpush1.bf16.msra.mxu0 0
      %1011 = vmatprep.subr.bf16.mxu0 %v992
      %1012 = vmatpush1.bf16.msra.mxu0 %v989
      %1013 = vmatprep.subr.bf16.mxu0 0
      %1014 = vmatpush2.bf16.msra.mxu0 0
      %1015 = vmatprep.subr.bf16.mxu0 0
      %1016 = vmatpush2.bf16.msra.mxu0 0
      %1017 = vmatprep.subr.bf16.mxu0 0
      %1018 = vmatpush2.bf16.msra.mxu0 0
      %1019 = vmatprep.subr.bf16.mxu0 0
      %1020 = vmatpush2.bf16.msra.mxu0 0
      %1021 = vmatprep.subr.bf16.mxu0 0
      %1022 = vmatpush2.bf16.msra.mxu0 0
      %1023 = vmatprep.subr.bf16.mxu0 0
      %1024 = vmatpush2.bf16.msra.mxu0 0
      %1025 = vmatprep.subr.bf16.mxu0 0
      %1026 = vmatpush2.bf16.msra.mxu0 0
      %1027 = vmatprep.subr.bf16.mxu0 0
      %1028 = vmatpush2.bf16.msra.mxu0 0
      %1029 = vmatprep.mubr.bf16.mxu0 0
      %1030 = vmatmul.mubr.bf16.gmra.mxu0 %v986
      %v1031 = vpop.f32.mrf.mxu0
      %v1032 = vadd.f32 0.0, %v1031
      %v1033 = vpop.f32.mrf.mxu0
      %v1034 = vadd.f32 0.0, %v1033
      %v1035 = vpop.f32.mrf.mxu0
      %v1036 = vpop.f32.mrf.mxu0
      %1037 = vdwg.mxu0
      %1038 = vmatprep.subr.bf16.mxu0 0
      %1039 = vmatpush1.bf16.msra.mxu0 0
      %1040 = vmatprep.subr.bf16.mxu0 0
      %1041 = vmatpush1.bf16.msra.mxu0 0
      %1042 = vmatprep.subr.bf16.mxu0 0
      %1043 = vmatpush1.bf16.msra.mxu0 0
      %1044 = vmatprep.subr.bf16.mxu0 0
      %1045 = vmatpush1.bf16.msra.mxu0 0
      %1046 = vmatprep.subr.bf16.mxu0 0
      %1047 = vmatpush1.bf16.msra.mxu0 0
      %1048 = vmatprep.subr.bf16.mxu0 0
      %1049 = vmatpush1.bf16.msra.mxu0 0
      %1050 = vmatprep.subr.bf16.mxu0 0
      %1051 = vmatpush1.bf16.msra.mxu0 0
      %1052 = vmatprep.subr.bf16.mxu0 0
      %1053 = vmatpush1.bf16.msra.mxu0 %v995
      %1054 = vmatprep.subr.bf16.mxu0 0
      %1055 = vmatpush2.bf16.msra.mxu0 0
      %1056 = vmatprep.subr.bf16.mxu0 0
      %1057 = vmatpush2.bf16.msra.mxu0 0
      %1058 = vmatprep.subr.bf16.mxu0 0
      %1059 = vmatpush2.bf16.msra.mxu0 0
      %1060 = vmatprep.subr.bf16.mxu0 0
      %1061 = vmatpush2.bf16.msra.mxu0 0
      %1062 = vmatprep.subr.bf16.mxu0 0
      %1063 = vmatpush2.bf16.msra.mxu0 0
      %1064 = vmatprep.subr.bf16.mxu0 0
      %1065 = vmatpush2.bf16.msra.mxu0 0
      %1066 = vmatprep.subr.bf16.mxu0 0
      %1067 = vmatpush2.bf16.msra.mxu0 0
      %1068 = vmatprep.subr.bf16.mxu0 0
      %1069 = vmatpush2.bf16.msra.mxu0 0
      %1070 = vmatprep.mubr.bf16.mxu0 0
      %1071 = vmatmul.mubr.bf16.gmra.mxu0 %v986
      %v1072 = vpop.f32.mrf.mxu0
      %v1073 = vadd.f32 0.0, %v1072
      %v1074 = vpop.f32.mrf.mxu0
      %v1075 = vpop.f32.mrf.mxu0
      %v1076 = vpop.f32.mrf.mxu0
      %1077 = vdwg.mxu0
      %v1078 = vadd.f32 %v968, %v1032
      %v1079 = vadd.f32 %v969, %v1034
      %v1080 = vadd.f32 %v970, %v1073
      %s1081 = scalar_lea.vmem %s1, 32
      %v1082 = vld [vmem:[%s1081] sm:$0xf]
      %1083 = vrot.lane.b32.xlu0 %v211, 90
      %v1084 = vpop.permute.xlu0 %1083
      %1085 = vrot.lane.b32.xlu0 %v219, 90
      %v1086 = vpop.permute.xlu0 %1085
      %1087 = vrot.lane.b32.xlu0 %v218, 90
      %v1088 = vpop.permute.xlu0 %1087
      %1089 = vrot.lane.b32.xlu0 %v220, 90
      %v1090 = vpop.permute.xlu0 %1089
      %vm1091 = vcmask 736256
      %v1092 = vsel %vm1091, %v1084, %v1086
      %v1093 = vsel %vm1091, %v1086, %v1088
      %v1094 = vsel %vm1091, %v1088, %v1090
      %v1096 = vsel %vm233, %v1082, 0
      %v1099 = vsel %vm237, %v1092, 0
      %v1102 = vsel %vm237, %v1093, 0
      %v1105 = vsel %vm237, %v1094, 0
      %1107 = vmatprep.subr.bf16.mxu0 0
      %1108 = vmatpush1.bf16.msra.mxu0 0
      %1109 = vmatprep.subr.bf16.mxu0 0
      %1110 = vmatpush1.bf16.msra.mxu0 0
      %1111 = vmatprep.subr.bf16.mxu0 0
      %1112 = vmatpush1.bf16.msra.mxu0 0
      %1113 = vmatprep.subr.bf16.mxu0 0
      %1114 = vmatpush1.bf16.msra.mxu0 0
      %1115 = vmatprep.subr.bf16.mxu0 0
      %1116 = vmatpush1.bf16.msra.mxu0 0
      %1117 = vmatprep.subr.bf16.mxu0 0
      %1118 = vmatpush1.bf16.msra.mxu0 0
      %1119 = vmatprep.subr.bf16.mxu0 0
      %1120 = vmatpush1.bf16.msra.mxu0 0
      %1121 = vmatprep.subr.bf16.mxu0 %v1102
      %1122 = vmatpush1.bf16.msra.mxu0 %v1099
      %1123 = vmatprep.subr.bf16.mxu0 0
      %1124 = vmatpush2.bf16.msra.mxu0 0
      %1125 = vmatprep.subr.bf16.mxu0 0
      %1126 = vmatpush2.bf16.msra.mxu0 0
      %1127 = vmatprep.subr.bf16.mxu0 0
      %1128 = vmatpush2.bf16.msra.mxu0 0
      %1129 = vmatprep.subr.bf16.mxu0 0
      %1130 = vmatpush2.bf16.msra.mxu0 0
      %1131 = vmatprep.subr.bf16.mxu0 0
      %1132 = vmatpush2.bf16.msra.mxu0 0
      %1133 = vmatprep.subr.bf16.mxu0 0
      %1134 = vmatpush2.bf16.msra.mxu0 0
      %1135 = vmatprep.subr.bf16.mxu0 0
      %1136 = vmatpush2.bf16.msra.mxu0 0
      %1137 = vmatprep.subr.bf16.mxu0 0
      %1138 = vmatpush2.bf16.msra.mxu0 0
      %1139 = vmatprep.mubr.bf16.mxu0 0
      %1140 = vmatmul.mubr.bf16.gmra.mxu0 %v1096
      %v1141 = vpop.f32.mrf.mxu0
      %v1142 = vadd.f32 0.0, %v1141
      %v1143 = vpop.f32.mrf.mxu0
      %v1144 = vadd.f32 0.0, %v1143
      %v1145 = vpop.f32.mrf.mxu0
      %v1146 = vpop.f32.mrf.mxu0
      %1147 = vdwg.mxu0
      %1148 = vmatprep.subr.bf16.mxu0 0
      %1149 = vmatpush1.bf16.msra.mxu0 0
      %1150 = vmatprep.subr.bf16.mxu0 0
      %1151 = vmatpush1.bf16.msra.mxu0 0
      %1152 = vmatprep.subr.bf16.mxu0 0
      %1153 = vmatpush1.bf16.msra.mxu0 0
      %1154 = vmatprep.subr.bf16.mxu0 0
      %1155 = vmatpush1.bf16.msra.mxu0 0
      %1156 = vmatprep.subr.bf16.mxu0 0
      %1157 = vmatpush1.bf16.msra.mxu0 0
      %1158 = vmatprep.subr.bf16.mxu0 0
      %1159 = vmatpush1.bf16.msra.mxu0 0
      %1160 = vmatprep.subr.bf16.mxu0 0
      %1161 = vmatpush1.bf16.msra.mxu0 0
      %1162 = vmatprep.subr.bf16.mxu0 0
      %1163 = vmatpush1.bf16.msra.mxu0 %v1105
      %1164 = vmatprep.subr.bf16.mxu0 0
      %1165 = vmatpush2.bf16.msra.mxu0 0
      %1166 = vmatprep.subr.bf16.mxu0 0
      %1167 = vmatpush2.bf16.msra.mxu0 0
      %1168 = vmatprep.subr.bf16.mxu0 0
      %1169 = vmatpush2.bf16.msra.mxu0 0
      %1170 = vmatprep.subr.bf16.mxu0 0
      %1171 = vmatpush2.bf16.msra.mxu0 0
      %1172 = vmatprep.subr.bf16.mxu0 0
      %1173 = vmatpush2.bf16.msra.mxu0 0
      %1174 = vmatprep.subr.bf16.mxu0 0
      %1175 = vmatpush2.bf16.msra.mxu0 0
      %1176 = vmatprep.subr.bf16.mxu0 0
      %1177 = vmatpush2.bf16.msra.mxu0 0
      %1178 = vmatprep.subr.bf16.mxu0 0
      %1179 = vmatpush2.bf16.msra.mxu0 0
      %1180 = vmatprep.mubr.bf16.mxu0 0
      %1181 = vmatmul.mubr.bf16.gmra.mxu0 %v1096
      %v1182 = vpop.f32.mrf.mxu0
      %v1183 = vadd.f32 0.0, %v1182
      %v1184 = vpop.f32.mrf.mxu0
      %v1185 = vpop.f32.mrf.mxu0
      %v1186 = vpop.f32.mrf.mxu0
      %1187 = vdwg.mxu0
      %v1188 = vadd.f32 %v1078, %v1142
      %v1189 = vadd.f32 %v1079, %v1144
      %v1190 = vadd.f32 %v1080, %v1183
      %v1191 = vld [vmem:[%s2] sm:$0xff]
      %1193 = vset.pattern.permute.xlu0 0
      %1194 = vperm.xlu0 %1193, %v1191
      %v1195 = vpop.permute.xlu0 %1194
      %v1197 = vmul.f32 %v1188, %v1195
      %v1198 = vmul.f32 %v1189, %v1195
      %v1199 = vmul.f32 %v1190, %v1195
      %v1200 = vld [vmem:[%s3] sm:$0xff]
      %1202 = vset.pattern.permute.xlu0 0
      %1203 = vperm.xlu0 %1202, %v1200
      %v1204 = vpop.permute.xlu0 %1203
      %v1206 = vadd.f32 %v1197, %v1204
      %v1207 = vadd.f32 %v1198, %v1204
      %v1208 = vadd.f32 %v1199, %v1204
      %v1209 = vmax.f32 %v1206, 0.0
      %v1210 = vmax.f32 %v1207, 0.0
      %v1211 = vmax.f32 %v1208, 0.0
      %1212 = vst [vmem:[%s197] sm:$0xff] %v1209
      %1213 = vst [vmem:[%s197 + $0x8] sm:$0xff] %v1210
      %1214 = vst [vmem:[%s197 + $0x10] sm:$0xff] %v1211
      %p1215 = scmp.lt.s32.totalorder %s15, 1
      %s1216 = scalar_select %p1215, %s15, 1
      %s1217 = smul.addr %s1216, 3
      %s1218 = smul.addr %s1217, 8
      %s1219 = scalar_lea.vmem %s4, %s1218
      // Predicated region
      $region37: #{basic_conv_forward.3} parent=35 // pred_check
        %p1220 = pneg %p122
      $region38: #{basic_conv_forward.3} parent=35 // pred_check_branch
        %1222 = sbr.rel (%p1220) target = $region40
      $region39: #{basic_conv_forward.3} parent=35 // pred_region
        _
      $region40: #{basic_conv_forward.3} parent=35 // pred_fallthru
        _
    $region36: #{basic_conv_forward.3} parent=5 // pred_fallthru
      _
    %p1223 = scmp.le.s32.totalorder 2, %s10
    // Predicated region
    $region41: #{basic_conv_forward.3} parent=5 // pred_check
      %p1224 = pneg %p1223
    $region42: #{basic_conv_forward.3} parent=5 // pred_check_branch
      %1226 = sbr.rel (%p1224) target = $region44
    $region43: #{basic_conv_forward.3} parent=5 // pred_region
      %s1227 = ssub.s32 %s10, 2
      // Predicated region
      $region45: #{basic_conv_forward.3} parent=43 // pred_check
        %p1228 = pneg %p128
      $region46: #{basic_conv_forward.3} parent=43 // pred_check_branch
        %1230 = sbr.rel (%p1228) target = $region48
      $region47: #{basic_conv_forward.3} parent=43 // pred_region
        %p1231 = scmp.lt.s32.totalorder %s16, 1
        %s1232 = scalar_select %p1231, %s16, 1
        %s1233 = smul.addr %s1232, 3
        %s1234 = smul.addr %s1233, 8
        %s1235 = scalar_lea.vmem %s4, %s1234
      $region48: #{basic_conv_forward.3} parent=43 // pred_fallthru
        _
    $region44: #{basic_conv_forward.3} parent=5 // pred_fallthru
      _
  $region6: #{basic_conv_forward.3} parent=0 // loop_footer
    %s14 = sadd.s32 1, %s10
  $region7: #{basic_conv_forward.3} parent=0 // loop_footer_branch
    %9 = sbr.rel target = $region3
  $region8: #{basic_conv_forward.3} parent=0 // loop_exit
    _

// kernel: basic_conv_forward.2
$region0: #{basic_conv_forward.2}
  #allocation0 [shape = 'u32[]', space=smem, size = 0x4, offset = 0x4, fixed_abs, tag = 'smem constant byte address 0x4 - core index']
  #allocation1 [shape = 'u32[144,128]{1,0:T(1,128)}', space=vmem, size = 0x12000, scoped, tag = 'internal scratch']
  %s0 = inlined_call_operand.vmem [shape: bf16[2,4,512], index: 0, kind: input, shape index: {}]
  %s1 = inlined_call_operand.vmem [shape: bf16[9,8,4], index: 1, kind: input, shape index: {}]
  %s2 = inlined_call_operand.vmem [shape: f32[1,384], index: 2, kind: input, shape index: {}]
  %s3 = inlined_call_operand.vmem [shape: f32[2,8,1], index: 3, kind: output, shape index: {0}]
  %s4 = inlined_call_operand.vmem [shape: f32[2,8,1], index: 4, kind: output, shape index: {1}]
  %5 = xla_tuple %s3, %s4
  %s6 = sld [smem:[#allocation0]]
  $region53: #{basic_conv_forward.2} parent=0
    _
  %s8 = ssub.s32 1, %s6
  %s9 = scalar_select 0, %s8, %s6
  loop: start=0, step=1, limit=4
  $region2: #{basic_conv_forward.2} parent=0 // loop_pre_header
    _
  $region3: #{basic_conv_forward.2} parent=0 // loop_header
    %s11 = sphi 0, %s15
    %p12 = scmp.ge.s32.totalorder %s11, 4
    %s21 = sphi 0, %s23
    %s24 = sphi 0, %s21
    %s25 = sphi 0, %s24
    %s41 = sphi 0, %s25
    %s45 = sphi 0, %s45
    %s47 = sphi 0, %s45
    %s48 = sphi 0, %s47
    %s62 = sphi 0, %s48
    %s66 = sphi 0, %s66
    %s68 = sphi 0, %s66
    %s69 = sphi 0, %s68
    %s83 = sphi 0, %s69
    %s89 = sphi 0, %s91
    %s92 = sphi 0, %s89
    %s93 = sphi 0, %s92
    %s109 = sphi 0, %s93
    %s115 = sphi 0, %s117
    %s118 = sphi 0, %s115
    %s119 = sphi 0, %s118
    %s135 = sphi 0, %s119
  $region4: #{basic_conv_forward.2} parent=0 // loop_header_branch
    %14 = sbr.rel (%p12) target = $region8
  $region5: #{basic_conv_forward.2} parent=0 // loop_body
    %s16 = ssub.s32 %s11, 1
    %s17 = ssub.s32 %s11, 2
    %s18 = sadd.s32 %s11, 1
    %s19 = ssub.s32 %s11, %s18
    %p20 = scmp.eq.s32.totalorder %s19, 0
    %s22 = sadd.s32 %s21, 1
    %s23 = scalar_select %p20, %s21, %s22
    %p26 = pneg %p20
    %p27 = scmp.eq.s32.totalorder %s11, 1
    %p28 = por %p26, %p27
    %p29 = scmp.ne.s32.totalorder %s21, %s24
    %p30 = scmp.eq.s32.totalorder %s11, 0
    %p31 = por %p29, %p30
    %p32 = scmp.ne.s32.totalorder %s21, %s24
    %p33 = scmp.eq.s32.totalorder %s16, 1
    %p34 = por %p32, %p33
    %p35 = scmp.ne.s32.totalorder %s24, %s25
    %p36 = scmp.eq.s32.totalorder %s16, 0
    %p37 = por %p35, %p36
    %p38 = scmp.ne.s32.totalorder %s24, %s25
    %p39 = scmp.eq.s32.totalorder %s17, 1
    %p40 = por %p38, %p39
    %p42 = scmp.ne.s32.totalorder %s25, %s41
    %p43 = scmp.eq.s32.totalorder %s17, 0
    %p44 = por %p42, %p43
    %s46 = sadd.s32 %s45, 1
    %p49 = scmp.eq.s32.totalorder %s11, 1
    %p50 = scmp.ne.s32.totalorder %s45, %s47
    %p51 = scmp.eq.s32.totalorder %s11, 0
    %p52 = por %p50, %p51
    %p53 = scmp.ne.s32.totalorder %s45, %s47
    %p54 = scmp.eq.s32.totalorder %s16, 1
    %p55 = por %p53, %p54
    %p56 = scmp.ne.s32.totalorder %s47, %s48
    %p57 = scmp.eq.s32.totalorder %s16, 0
    %p58 = por %p56, %p57
    %p59 = scmp.ne.s32.totalorder %s47, %s48
    %p60 = scmp.eq.s32.totalorder %s17, 1
    %p61 = por %p59, %p60
    %p63 = scmp.ne.s32.totalorder %s48, %s62
    %p64 = scmp.eq.s32.totalorder %s17, 0
    %p65 = por %p63, %p64
    %s67 = sadd.s32 %s66, 1
    %p70 = scmp.eq.s32.totalorder %s11, 1
    %p71 = scmp.ne.s32.totalorder %s66, %s68
    %p72 = scmp.eq.s32.totalorder %s11, 0
    %p73 = por %p71, %p72
    %p74 = scmp.ne.s32.totalorder %s66, %s68
    %p75 = scmp.eq.s32.totalorder %s16, 1
    %p76 = por %p74, %p75
    %p77 = scmp.ne.s32.totalorder %s68, %s69
    %p78 = scmp.eq.s32.totalorder %s16, 0
    %p79 = por %p77, %p78
    %p80 = scmp.ne.s32.totalorder %s68, %s69
    %p81 = scmp.eq.s32.totalorder %s17, 1
    %p82 = por %p80, %p81
    %p84 = scmp.ne.s32.totalorder %s69, %s83
    %p85 = scmp.eq.s32.totalorder %s17, 0
    %p86 = por %p84, %p85
    %s87 = ssub.s32 %s11, %s18
    %p88 = scmp.eq.s32.totalorder %s87, 0
    %s90 = sadd.s32 %s89, 1
    %s91 = scalar_select %p88, %s89, %s90
    %p94 = pneg %p88
    %p95 = scmp.eq.s32.totalorder %s11, 1
    %p96 = por %p94, %p95
    %p97 = scmp.ne.s32.totalorder %s89, %s92
    %p98 = scmp.eq.s32.totalorder %s11, 0
    %p99 = por %p97, %p98
    %p100 = scmp.ne.s32.totalorder %s89, %s92
    %p101 = scmp.eq.s32.totalorder %s16, 1
    %p102 = por %p100, %p101
    %p103 = scmp.ne.s32.totalorder %s92, %s93
    %p104 = scmp.eq.s32.totalorder %s16, 0
    %p105 = por %p103, %p104
    %p106 = scmp.ne.s32.totalorder %s92, %s93
    %p107 = scmp.eq.s32.totalorder %s17, 1
    %p108 = por %p106, %p107
    %p110 = scmp.ne.s32.totalorder %s93, %s109
    %p111 = scmp.eq.s32.totalorder %s17, 0
    %p112 = por %p110, %p111
    %s113 = ssub.s32 %s11, %s18
    %p114 = scmp.eq.s32.totalorder %s113, 0
    %s116 = sadd.s32 %s115, 1
    %s117 = scalar_select %p114, %s115, %s116
    %p120 = pneg %p114
    %p121 = scmp.eq.s32.totalorder %s11, 1
    %p122 = por %p120, %p121
    %p123 = scmp.ne.s32.totalorder %s115, %s118
    %p124 = scmp.eq.s32.totalorder %s11, 0
    %p125 = por %p123, %p124
    %p126 = scmp.ne.s32.totalorder %s115, %s118
    %p127 = scmp.eq.s32.totalorder %s16, 1
    %p128 = por %p126, %p127
    %p129 = scmp.ne.s32.totalorder %s118, %s119
    %p130 = scmp.eq.s32.totalorder %s16, 0
    %p131 = por %p129, %p130
    %p132 = scmp.ne.s32.totalorder %s118, %s119
    %p133 = scmp.eq.s32.totalorder %s17, 1
    %p134 = por %p132, %p133
    %p136 = scmp.ne.s32.totalorder %s119, %s135
    %p137 = scmp.eq.s32.totalorder %s17, 0
    %p138 = por %p136, %p137
    %p139 = scmp.le.s32.totalorder 1, %s11
    %p140 = scmp.lt.s32.totalorder %s11, 3
    %p141 = pnand %p139, %p140
    %p142 = pneg %p141
    // Predicated region
    $region9: #{basic_conv_forward.2} parent=5 // pred_check
      _
    $region10: #{basic_conv_forward.2} parent=5 // pred_check_branch
      %144 = sbr.rel (%p141) target = $region12
    $region11: #{basic_conv_forward.2} parent=5 // pred_region
      %s145 = ssub.s32 %s11, 1
      // Predicated region
      $region13: #{basic_conv_forward.2} parent=11 // pred_check
        %p146 = pneg %p58
      $region14: #{basic_conv_forward.2} parent=11 // pred_check_branch
        %148 = sbr.rel (%p146) target = $region16
      $region15: #{basic_conv_forward.2} parent=11 // pred_region
        _
      $region16: #{basic_conv_forward.2} parent=11 // pred_fallthru
        _
      // Predicated region
      $region17: #{basic_conv_forward.2} parent=11 // pred_check
        %p149 = pneg %p79
      $region18: #{basic_conv_forward.2} parent=11 // pred_check_branch
        %151 = sbr.rel (%p149) target = $region20
      $region19: #{basic_conv_forward.2} parent=11 // pred_region
        _
      $region20: #{basic_conv_forward.2} parent=11 // pred_fallthru
        _
    $region12: #{basic_conv_forward.2} parent=5 // pred_fallthru
      _
    %p152 = scmp.lt.s32.totalorder %s11, 2
    // Predicated region
    $region21: #{basic_conv_forward.2} parent=5 // pred_check
      %p153 = pneg %p152
    $region22: #{basic_conv_forward.2} parent=5 // pred_check_branch
      %155 = sbr.rel (%p153) target = $region24
    $region23: #{basic_conv_forward.2} parent=5 // pred_region
      // Predicated region
      $region25: #{basic_conv_forward.2} parent=23 // pred_check
        %p156 = pneg %p31
      $region26: #{basic_conv_forward.2} parent=23 // pred_check_branch
        %158 = sbr.rel (%p156) target = $region28
      $region27: #{basic_conv_forward.2} parent=23 // pred_region
        %p159 = scmp.lt.s32.totalorder %s11, 1
        %s160 = scalar_select %p159, %s11, 1
        %s161 = smul.addr %s160, 4
        %s162 = smul.addr %s161, 2
        %s163 = scalar_lea.vmem %s0, %s162
      $region28: #{basic_conv_forward.2} parent=23 // pred_fallthru
        _
    $region24: #{basic_conv_forward.2} parent=5 // pred_fallthru
      _
    %p164 = scmp.le.s32.totalorder 1, %s11
    %p165 = scmp.lt.s32.totalorder %s11, 3
    %p166 = pnand %p164, %p165
    %p167 = pneg %p166
    // Predicated region
    $region29: #{basic_conv_forward.2} parent=5 // pred_check
      _
    $region30: #{basic_conv_forward.2} parent=5 // pred_check_branch
      %169 = sbr.rel (%p166) target = $region32
    $region31: #{basic_conv_forward.2} parent=5 // pred_region
      %s170 = ssub.s32 %s11, 1
      %p171 = scmp.lt.s32.totalorder %s16, 1
      %s172 = scalar_select %p171, %s16, 1
      %s173 = smul.addr %s172, 4
      %s174 = smul.addr %s173, 2
      %s175 = scalar_lea.vmem %s0, %s174
      %p176 = pneg %p37
      %p177 = pneg %p34
      %p178 = pneg %p58
      %p179 = pneg %p55
      %p180 = pneg %p79
      %p181 = pneg %p76
      %p182 = pneg %p105
      %p183 = pneg %p102
      %p184 = scmp.lt.s32.totalorder %s16, 1
      %s185 = scalar_select %p184, %s16, 1
      %s186 = smul.addr %s185, 8
      %s187 = scalar_lea.vmem %s3, %s186
      %p188 = pneg %p131
      %p189 = pneg %p128
      %p190 = scmp.lt.s32.totalorder %s16, 1
      %s191 = scalar_select %p190, %s16, 1
      %s192 = smul.addr %s191, 8
      %s193 = scalar_lea.vmem %s4, %s192
      %p194 = scmp.lt.s32.totalorder %s16, 1
      %s195 = scalar_select %p194, %s16, 1
      %s196 = smul.addr %s195, 4
      %s197 = smul.addr %s196, 2
      %s198 = scalar_lea.vmem %s0, %s197
      %p199 = scmp.lt.s32.totalorder %s16, 1
      %s200 = scalar_select %p199, %s16, 1
      %s201 = smul.addr %s200, 8
      %s202 = scalar_lea.vmem %s3, %s201
      %p203 = scmp.lt.s32.totalorder %s16, 1
      %s204 = scalar_select %p203, %s16, 1
      %s205 = smul.addr %s204, 8
      %s206 = scalar_lea.vmem %s4, %s205
      %v208 = vld [vmem:[%s198] sm:$0xff]
      %v209 = vld [vmem:[%s1] sm:$0xf]
      %s210 = scalar_lea.vmem %s1, 4
      %v211 = vld [vmem:[%s210] sm:$0xf]
      %v213 = vcombine.high %v208, %v208
      %v215 = vunpack.c.l.s4 1983009808
      %v216 = vunpack.c.0.s8 %v215
      %v217 = vlaneseq
      %v218 = vshrl.u32 %v217, 7
      %v219 = vsub.s32 %v216, %v218
      %v220 = vrot.slane %v208, %v219
      %v222 = vunpack.c.l.s4 1983009808
      %v223 = vunpack.c.0.s8 %v222
      %v224 = vlaneseq
      %v225 = vshrl.u32 %v224, 7
      %v226 = vsub.s32 %v223, %v225
      %v227 = vrot.slane %v213, %v226
      %v228 = vcombine.high %v220, %v220
      %v229 = vcombine.high %v227, %v227
      %230 = vrot.lane.b32.xlu0 %v220, 127
      %v231 = vpop.permute.xlu0 %230
      %232 = vrot.lane.b32.xlu0 %v228, 127
      %v233 = vpop.permute.xlu0 %232
      %234 = vrot.lane.b32.xlu0 %v227, 127
      %v235 = vpop.permute.xlu0 %234
      %236 = vrot.lane.b32.xlu0 %v229, 127
      %v237 = vpop.permute.xlu0 %236
      %vm238 = vcmask 1039360
      %v239 = vsel %vm238, %v231, %v233
      %v240 = vsel %vm238, %v233, %v235
      %v241 = vsel %vm238, %v235, %v237
      %vm242 = vcmask 31744
      %v244 = vsel %vm242, %v211, 0
      %vm246 = vcmask 1041408
      %v248 = vsel %vm246, %v239, 0
      %v251 = vsel %vm246, %v240, 0
      %v254 = vsel %vm246, %v241, 0
      %256 = vmatprep.subr.bf16.mxu0 0
      %257 = vmatpush1.bf16.msra.mxu0 0
      %258 = vmatprep.subr.bf16.mxu0 0
      %259 = vmatpush1.bf16.msra.mxu0 0
      %260 = vmatprep.subr.bf16.mxu0 0
      %261 = vmatpush1.bf16.msra.mxu0 0
      %262 = vmatprep.subr.bf16.mxu0 0
      %263 = vmatpush1.bf16.msra.mxu0 0
      %264 = vmatprep.subr.bf16.mxu0 0
      %265 = vmatpush1.bf16.msra.mxu0 0
      %266 = vmatprep.subr.bf16.mxu0 0
      %267 = vmatpush1.bf16.msra.mxu0 0
      %268 = vmatprep.subr.bf16.mxu0 0
      %269 = vmatpush1.bf16.msra.mxu0 0
      %270 = vmatprep.subr.bf16.mxu0 %v251
      %271 = vmatpush1.bf16.msra.mxu0 %v248
      %272 = vmatprep.subr.bf16.mxu0 0
      %273 = vmatpush2.bf16.msra.mxu0 0
      %274 = vmatprep.subr.bf16.mxu0 0
      %275 = vmatpush2.bf16.msra.mxu0 0
      %276 = vmatprep.subr.bf16.mxu0 0
      %277 = vmatpush2.bf16.msra.mxu0 0
      %278 = vmatprep.subr.bf16.mxu0 0
      %279 = vmatpush2.bf16.msra.mxu0 0
      %280 = vmatprep.subr.bf16.mxu0 0
      %281 = vmatpush2.bf16.msra.mxu0 0
      %282 = vmatprep.subr.bf16.mxu0 0
      %283 = vmatpush2.bf16.msra.mxu0 0
      %284 = vmatprep.subr.bf16.mxu0 0
      %285 = vmatpush2.bf16.msra.mxu0 0
      %286 = vmatprep.subr.bf16.mxu0 0
      %287 = vmatpush2.bf16.msra.mxu0 0
      %288 = vmatprep.mubr.bf16.mxu0 0
      %289 = vmatmul.mubr.bf16.gmra.mxu0 %v244
      %v290 = vpop.f32.mrf.mxu0
      %v291 = vadd.f32 0.0, %v290
      %v292 = vpop.f32.mrf.mxu0
      %v293 = vadd.f32 0.0, %v292
      %v294 = vpop.f32.mrf.mxu0
      %v295 = vpop.f32.mrf.mxu0
      %296 = vdwg.mxu0
      %297 = vmatprep.subr.bf16.mxu0 0
      %298 = vmatpush1.bf16.msra.mxu0 0
      %299 = vmatprep.subr.bf16.mxu0 0
      %300 = vmatpush1.bf16.msra.mxu0 0
      %301 = vmatprep.subr.bf16.mxu0 0
      %302 = vmatpush1.bf16.msra.mxu0 0
      %303 = vmatprep.subr.bf16.mxu0 0
      %304 = vmatpush1.bf16.msra.mxu0 0
      %305 = vmatprep.subr.bf16.mxu0 0
      %306 = vmatpush1.bf16.msra.mxu0 0
      %307 = vmatprep.subr.bf16.mxu0 0
      %308 = vmatpush1.bf16.msra.mxu0 0
      %309 = vmatprep.subr.bf16.mxu0 0
      %310 = vmatpush1.bf16.msra.mxu0 0
      %311 = vmatprep.subr.bf16.mxu0 0
      %312 = vmatpush1.bf16.msra.mxu0 %v254
      %313 = vmatprep.subr.bf16.mxu0 0
      %314 = vmatpush2.bf16.msra.mxu0 0
      %315 = vmatprep.subr.bf16.mxu0 0
      %316 = vmatpush2.bf16.msra.mxu0 0
      %317 = vmatprep.subr.bf16.mxu0 0
      %318 = vmatpush2.bf16.msra.mxu0 0
      %319 = vmatprep.subr.bf16.mxu0 0
      %320 = vmatpush2.bf16.msra.mxu0 0
      %321 = vmatprep.subr.bf16.mxu0 0
      %322 = vmatpush2.bf16.msra.mxu0 0
      %323 = vmatprep.subr.bf16.mxu0 0
      %324 = vmatpush2.bf16.msra.mxu0 0
      %325 = vmatprep.subr.bf16.mxu0 0
      %326 = vmatpush2.bf16.msra.mxu0 0
      %327 = vmatprep.subr.bf16.mxu0 0
      %328 = vmatpush2.bf16.msra.mxu0 0
      %329 = vmatprep.mubr.bf16.mxu0 0
      %330 = vmatmul.mubr.bf16.gmra.mxu0 %v244
      %v331 = vpop.f32.mrf.mxu0
      %v332 = vadd.f32 0.0, %v331
      %v333 = vpop.f32.mrf.mxu0
      %v334 = vpop.f32.mrf.mxu0
      %v335 = vpop.f32.mrf.mxu0
      %336 = vdwg.mxu0
      %v338 = vsel %vm242, %v209, 0
      %v341 = vsel %vm246, %v220, 0
      %v344 = vsel %vm246, %v228, 0
      %v347 = vsel %vm246, %v227, 0
      %349 = vmatprep.subr.bf16.mxu0 0
      %350 = vmatpush1.bf16.msra.mxu0 0
      %351 = vmatprep.subr.bf16.mxu0 0
      %352 = vmatpush1.bf16.msra.mxu0 0
      %353 = vmatprep.subr.bf16.mxu0 0
      %354 = vmatpush1.bf16.msra.mxu0 0
      %355 = vmatprep.subr.bf16.mxu0 0
      %356 = vmatpush1.bf16.msra.mxu0 0
      %357 = vmatprep.subr.bf16.mxu0 0
      %358 = vmatpush1.bf16.msra.mxu0 0
      %359 = vmatprep.subr.bf16.mxu0 0
      %360 = vmatpush1.bf16.msra.mxu0 0
      %361 = vmatprep.subr.bf16.mxu0 0
      %362 = vmatpush1.bf16.msra.mxu0 0
      %363 = vmatprep.subr.bf16.mxu0 %v344
      %364 = vmatpush1.bf16.msra.mxu0 %v341
      %365 = vmatprep.subr.bf16.mxu0 0
      %366 = vmatpush2.bf16.msra.mxu0 0
      %367 = vmatprep.subr.bf16.mxu0 0
      %368 = vmatpush2.bf16.msra.mxu0 0
      %369 = vmatprep.subr.bf16.mxu0 0
      %370 = vmatpush2.bf16.msra.mxu0 0
      %371 = vmatprep.subr.bf16.mxu0 0
      %372 = vmatpush2.bf16.msra.mxu0 0
      %373 = vmatprep.subr.bf16.mxu0 0
      %374 = vmatpush2.bf16.msra.mxu0 0
      %375 = vmatprep.subr.bf16.mxu0 0
      %376 = vmatpush2.bf16.msra.mxu0 0
      %377 = vmatprep.subr.bf16.mxu0 0
      %378 = vmatpush2.bf16.msra.mxu0 0
      %379 = vmatprep.subr.bf16.mxu0 0
      %380 = vmatpush2.bf16.msra.mxu0 0
      %381 = vmatprep.mubr.bf16.mxu0 0
      %382 = vmatmul.mubr.bf16.gmra.mxu0 %v338
      %v383 = vpop.f32.mrf.mxu0
      %v384 = vadd.f32 %v291, %v383
      %v385 = vpop.f32.mrf.mxu0
      %v386 = vadd.f32 %v293, %v385
      %v387 = vpop.f32.mrf.mxu0
      %v388 = vpop.f32.mrf.mxu0
      %389 = vdwg.mxu0
      %390 = vmatprep.subr.bf16.mxu0 0
      %391 = vmatpush1.bf16.msra.mxu0 0
      %392 = vmatprep.subr.bf16.mxu0 0
      %393 = vmatpush1.bf16.msra.mxu0 0
      %394 = vmatprep.subr.bf16.mxu0 0
      %395 = vmatpush1.bf16.msra.mxu0 0
      %396 = vmatprep.subr.bf16.mxu0 0
      %397 = vmatpush1.bf16.msra.mxu0 0
      %398 = vmatprep.subr.bf16.mxu0 0
      %399 = vmatpush1.bf16.msra.mxu0 0
      %400 = vmatprep.subr.bf16.mxu0 0
      %401 = vmatpush1.bf16.msra.mxu0 0
      %402 = vmatprep.subr.bf16.mxu0 0
      %403 = vmatpush1.bf16.msra.mxu0 0
      %404 = vmatprep.subr.bf16.mxu0 0
      %405 = vmatpush1.bf16.msra.mxu0 %v347
      %406 = vmatprep.subr.bf16.mxu0 0
      %407 = vmatpush2.bf16.msra.mxu0 0
      %408 = vmatprep.subr.bf16.mxu0 0
      %409 = vmatpush2.bf16.msra.mxu0 0
      %410 = vmatprep.subr.bf16.mxu0 0
      %411 = vmatpush2.bf16.msra.mxu0 0
      %412 = vmatprep.subr.bf16.mxu0 0
      %413 = vmatpush2.bf16.msra.mxu0 0
      %414 = vmatprep.subr.bf16.mxu0 0
      %415 = vmatpush2.bf16.msra.mxu0 0
      %416 = vmatprep.subr.bf16.mxu0 0
      %417 = vmatpush2.bf16.msra.mxu0 0
      %418 = vmatprep.subr.bf16.mxu0 0
      %419 = vmatpush2.bf16.msra.mxu0 0
      %420 = vmatprep.subr.bf16.mxu0 0
      %421 = vmatpush2.bf16.msra.mxu0 0
      %422 = vmatprep.mubr.bf16.mxu0 0
      %423 = vmatmul.mubr.bf16.gmra.mxu0 %v338
      %v424 = vpop.f32.mrf.mxu0
      %v425 = vadd.f32 %v332, %v424
      %v426 = vpop.f32.mrf.mxu0
      %v427 = vpop.f32.mrf.mxu0
      %v428 = vpop.f32.mrf.mxu0
      %429 = vdwg.mxu0
      %s430 = scalar_lea.vmem %s1, 8
      %v431 = vld [vmem:[%s430] sm:$0xf]
      %432 = vrot.lane.b32.xlu0 %v220, 126
      %v433 = vpop.permute.xlu0 %432
      %434 = vrot.lane.b32.xlu0 %v228, 126
      %v435 = vpop.permute.xlu0 %434
      %436 = vrot.lane.b32.xlu0 %v227, 126
      %v437 = vpop.permute.xlu0 %436
      %438 = vrot.lane.b32.xlu0 %v229, 126
      %v439 = vpop.permute.xlu0 %438
      %vm440 = vcmask 1031168
      %v441 = vsel %vm440, %v433, %v435
      %v442 = vsel %vm440, %v435, %v437
      %v443 = vsel %vm440, %v437, %v439
      %v445 = vsel %vm242, %v431, 0
      %v448 = vsel %vm246, %v441, 0
      %v451 = vsel %vm246, %v442, 0
      %v454 = vsel %vm246, %v443, 0
      %456 = vmatprep.subr.bf16.mxu0 0
      %457 = vmatpush1.bf16.msra.mxu0 0
      %458 = vmatprep.subr.bf16.mxu0 0
      %459 = vmatpush1.bf16.msra.mxu0 0
      %460 = vmatprep.subr.bf16.mxu0 0
      %461 = vmatpush1.bf16.msra.mxu0 0
      %462 = vmatprep.subr.bf16.mxu0 0
      %463 = vmatpush1.bf16.msra.mxu0 0
      %464 = vmatprep.subr.bf16.mxu0 0
      %465 = vmatpush1.bf16.msra.mxu0 0
      %466 = vmatprep.subr.bf16.mxu0 0
      %467 = vmatpush1.bf16.msra.mxu0 0
      %468 = vmatprep.subr.bf16.mxu0 0
      %469 = vmatpush1.bf16.msra.mxu0 0
      %470 = vmatprep.subr.bf16.mxu0 %v451
      %471 = vmatpush1.bf16.msra.mxu0 %v448
      %472 = vmatprep.subr.bf16.mxu0 0
      %473 = vmatpush2.bf16.msra.mxu0 0
      %474 = vmatprep.subr.bf16.mxu0 0
      %475 = vmatpush2.bf16.msra.mxu0 0
      %476 = vmatprep.subr.bf16.mxu0 0
      %477 = vmatpush2.bf16.msra.mxu0 0
      %478 = vmatprep.subr.bf16.mxu0 0
      %479 = vmatpush2.bf16.msra.mxu0 0
      %480 = vmatprep.subr.bf16.mxu0 0
      %481 = vmatpush2.bf16.msra.mxu0 0
      %482 = vmatprep.subr.bf16.mxu0 0
      %483 = vmatpush2.bf16.msra.mxu0 0
      %484 = vmatprep.subr.bf16.mxu0 0
      %485 = vmatpush2.bf16.msra.mxu0 0
      %486 = vmatprep.subr.bf16.mxu0 0
      %487 = vmatpush2.bf16.msra.mxu0 0
      %488 = vmatprep.mubr.bf16.mxu0 0
      %489 = vmatmul.mubr.bf16.gmra.mxu0 %v445
      %v490 = vpop.f32.mrf.mxu0
      %v491 = vadd.f32 0.0, %v490
      %v492 = vpop.f32.mrf.mxu0
      %v493 = vadd.f32 0.0, %v492
      %v494 = vpop.f32.mrf.mxu0
      %v495 = vpop.f32.mrf.mxu0
      %496 = vdwg.mxu0
      %497 = vmatprep.subr.bf16.mxu0 0
      %498 = vmatpush1.bf16.msra.mxu0 0
      %499 = vmatprep.subr.bf16.mxu0 0
      %500 = vmatpush1.bf16.msra.mxu0 0
      %501 = vmatprep.subr.bf16.mxu0 0
      %502 = vmatpush1.bf16.msra.mxu0 0
      %503 = vmatprep.subr.bf16.mxu0 0
      %504 = vmatpush1.bf16.msra.mxu0 0
      %505 = vmatprep.subr.bf16.mxu0 0
      %506 = vmatpush1.bf16.msra.mxu0 0
      %507 = vmatprep.subr.bf16.mxu0 0
      %508 = vmatpush1.bf16.msra.mxu0 0
      %509 = vmatprep.subr.bf16.mxu0 0
      %510 = vmatpush1.bf16.msra.mxu0 0
      %511 = vmatprep.subr.bf16.mxu0 0
      %512 = vmatpush1.bf16.msra.mxu0 %v454
      %513 = vmatprep.subr.bf16.mxu0 0
      %514 = vmatpush2.bf16.msra.mxu0 0
      %515 = vmatprep.subr.bf16.mxu0 0
      %516 = vmatpush2.bf16.msra.mxu0 0
      %517 = vmatprep.subr.bf16.mxu0 0
      %518 = vmatpush2.bf16.msra.mxu0 0
      %519 = vmatprep.subr.bf16.mxu0 0
      %520 = vmatpush2.bf16.msra.mxu0 0
      %521 = vmatprep.subr.bf16.mxu0 0
      %522 = vmatpush2.bf16.msra.mxu0 0
      %523 = vmatprep.subr.bf16.mxu0 0
      %524 = vmatpush2.bf16.msra.mxu0 0
      %525 = vmatprep.subr.bf16.mxu0 0
      %526 = vmatpush2.bf16.msra.mxu0 0
      %527 = vmatprep.subr.bf16.mxu0 0
      %528 = vmatpush2.bf16.msra.mxu0 0
      %529 = vmatprep.mubr.bf16.mxu0 0
      %530 = vmatmul.mubr.bf16.gmra.mxu0 %v445
      %v531 = vpop.f32.mrf.mxu0
      %v532 = vadd.f32 0.0, %v531
      %v533 = vpop.f32.mrf.mxu0
      %v534 = vpop.f32.mrf.mxu0
      %v535 = vpop.f32.mrf.mxu0
      %536 = vdwg.mxu0
      %v537 = vadd.f32 %v384, %v491
      %v538 = vadd.f32 %v386, %v493
      %v539 = vadd.f32 %v425, %v532
      %s540 = scalar_lea.vmem %s1, 12
      %v541 = vld [vmem:[%s540] sm:$0xf]
      %542 = vrot.lane.b32.xlu0 %v220, 110
      %v543 = vpop.permute.xlu0 %542
      %544 = vrot.lane.b32.xlu0 %v228, 110
      %v545 = vpop.permute.xlu0 %544
      %546 = vrot.lane.b32.xlu0 %v227, 110
      %v547 = vpop.permute.xlu0 %546
      %548 = vrot.lane.b32.xlu0 %v229, 110
      %v549 = vpop.permute.xlu0 %548
      %vm550 = vcmask 900096
      %v551 = vsel %vm550, %v543, %v545
      %v552 = vsel %vm550, %v545, %v547
      %v553 = vsel %vm550, %v547, %v549
      %v555 = vsel %vm242, %v541, 0
      %v558 = vsel %vm246, %v551, 0
      %v561 = vsel %vm246, %v552, 0
      %v564 = vsel %vm246, %v553, 0
      %566 = vmatprep.subr.bf16.mxu0 0
      %567 = vmatpush1.bf16.msra.mxu0 0
      %568 = vmatprep.subr.bf16.mxu0 0
      %569 = vmatpush1.bf16.msra.mxu0 0
      %570 = vmatprep.subr.bf16.mxu0 0
      %571 = vmatpush1.bf16.msra.mxu0 0
      %572 = vmatprep.subr.bf16.mxu0 0
      %573 = vmatpush1.bf16.msra.mxu0 0
      %574 = vmatprep.subr.bf16.mxu0 0
      %575 = vmatpush1.bf16.msra.mxu0 0
      %576 = vmatprep.subr.bf16.mxu0 0
      %577 = vmatpush1.bf16.msra.mxu0 0
      %578 = vmatprep.subr.bf16.mxu0 0
      %579 = vmatpush1.bf16.msra.mxu0 0
      %580 = vmatprep.subr.bf16.mxu0 %v561
      %581 = vmatpush1.bf16.msra.mxu0 %v558
      %582 = vmatprep.subr.bf16.mxu0 0
      %583 = vmatpush2.bf16.msra.mxu0 0
      %584 = vmatprep.subr.bf16.mxu0 0
      %585 = vmatpush2.bf16.msra.mxu0 0
      %586 = vmatprep.subr.bf16.mxu0 0
      %587 = vmatpush2.bf16.msra.mxu0 0
      %588 = vmatprep.subr.bf16.mxu0 0
      %589 = vmatpush2.bf16.msra.mxu0 0
      %590 = vmatprep.subr.bf16.mxu0 0
      %591 = vmatpush2.bf16.msra.mxu0 0
      %592 = vmatprep.subr.bf16.mxu0 0
      %593 = vmatpush2.bf16.msra.mxu0 0
      %594 = vmatprep.subr.bf16.mxu0 0
      %595 = vmatpush2.bf16.msra.mxu0 0
      %596 = vmatprep.subr.bf16.mxu0 0
      %597 = vmatpush2.bf16.msra.mxu0 0
      %598 = vmatprep.mubr.bf16.mxu0 0
      %599 = vmatmul.mubr.bf16.gmra.mxu0 %v555
      %v600 = vpop.f32.mrf.mxu0
      %v601 = vadd.f32 0.0, %v600
      %v602 = vpop.f32.mrf.mxu0
      %v603 = vadd.f32 0.0, %v602
      %v604 = vpop.f32.mrf.mxu0
      %v605 = vpop.f32.mrf.mxu0
      %606 = vdwg.mxu0
      %607 = vmatprep.subr.bf16.mxu0 0
      %608 = vmatpush1.bf16.msra.mxu0 0
      %609 = vmatprep.subr.bf16.mxu0 0
      %610 = vmatpush1.bf16.msra.mxu0 0
      %611 = vmatprep.subr.bf16.mxu0 0
      %612 = vmatpush1.bf16.msra.mxu0 0
      %613 = vmatprep.subr.bf16.mxu0 0
      %614 = vmatpush1.bf16.msra.mxu0 0
      %615 = vmatprep.subr.bf16.mxu0 0
      %616 = vmatpush1.bf16.msra.mxu0 0
      %617 = vmatprep.subr.bf16.mxu0 0
      %618 = vmatpush1.bf16.msra.mxu0 0
      %619 = vmatprep.subr.bf16.mxu0 0
      %620 = vmatpush1.bf16.msra.mxu0 0
      %621 = vmatprep.subr.bf16.mxu0 0
      %622 = vmatpush1.bf16.msra.mxu0 %v564
      %623 = vmatprep.subr.bf16.mxu0 0
      %624 = vmatpush2.bf16.msra.mxu0 0
      %625 = vmatprep.subr.bf16.mxu0 0
      %626 = vmatpush2.bf16.msra.mxu0 0
      %627 = vmatprep.subr.bf16.mxu0 0
      %628 = vmatpush2.bf16.msra.mxu0 0
      %629 = vmatprep.subr.bf16.mxu0 0
      %630 = vmatpush2.bf16.msra.mxu0 0
      %631 = vmatprep.subr.bf16.mxu0 0
      %632 = vmatpush2.bf16.msra.mxu0 0
      %633 = vmatprep.subr.bf16.mxu0 0
      %634 = vmatpush2.bf16.msra.mxu0 0
      %635 = vmatprep.subr.bf16.mxu0 0
      %636 = vmatpush2.bf16.msra.mxu0 0
      %637 = vmatprep.subr.bf16.mxu0 0
      %638 = vmatpush2.bf16.msra.mxu0 0
      %639 = vmatprep.mubr.bf16.mxu0 0
      %640 = vmatmul.mubr.bf16.gmra.mxu0 %v555
      %v641 = vpop.f32.mrf.mxu0
      %v642 = vadd.f32 0.0, %v641
      %v643 = vpop.f32.mrf.mxu0
      %v644 = vpop.f32.mrf.mxu0
      %v645 = vpop.f32.mrf.mxu0
      %646 = vdwg.mxu0
      %v647 = vadd.f32 %v537, %v601
      %v648 = vadd.f32 %v538, %v603
      %v649 = vadd.f32 %v539, %v642
      %s650 = scalar_lea.vmem %s1, 16
      %v651 = vld [vmem:[%s650] sm:$0xf]
      %652 = vrot.lane.b32.xlu0 %v220, 109
      %v653 = vpop.permute.xlu0 %652
      %654 = vrot.lane.b32.xlu0 %v228, 109
      %v655 = vpop.permute.xlu0 %654
      %656 = vrot.lane.b32.xlu0 %v227, 109
      %v657 = vpop.permute.xlu0 %656
      %658 = vrot.lane.b32.xlu0 %v229, 109
      %v659 = vpop.permute.xlu0 %658
      %vm660 = vcmask 891904
      %v661 = vsel %vm660, %v653, %v655
      %v662 = vsel %vm660, %v655, %v657
      %v663 = vsel %vm660, %v657, %v659
      %v665 = vsel %vm242, %v651, 0
      %v668 = vsel %vm246, %v661, 0
      %v671 = vsel %vm246, %v662, 0
      %v674 = vsel %vm246, %v663, 0
      %676 = vmatprep.subr.bf16.mxu0 0
      %677 = vmatpush1.bf16.msra.mxu0 0
      %678 = vmatprep.subr.bf16.mxu0 0
      %679 = vmatpush1.bf16.msra.mxu0 0
      %680 = vmatprep.subr.bf16.mxu0 0
      %681 = vmatpush1.bf16.msra.mxu0 0
      %682 = vmatprep.subr.bf16.mxu0 0
      %683 = vmatpush1.bf16.msra.mxu0 0
      %684 = vmatprep.subr.bf16.mxu0 0
      %685 = vmatpush1.bf16.msra.mxu0 0
      %686 = vmatprep.subr.bf16.mxu0 0
      %687 = vmatpush1.bf16.msra.mxu0 0
      %688 = vmatprep.subr.bf16.mxu0 0
      %689 = vmatpush1.bf16.msra.mxu0 0
      %690 = vmatprep.subr.bf16.mxu0 %v671
      %691 = vmatpush1.bf16.msra.mxu0 %v668
      %692 = vmatprep.subr.bf16.mxu0 0
      %693 = vmatpush2.bf16.msra.mxu0 0
      %694 = vmatprep.subr.bf16.mxu0 0
      %695 = vmatpush2.bf16.msra.mxu0 0
      %696 = vmatprep.subr.bf16.mxu0 0
      %697 = vmatpush2.bf16.msra.mxu0 0
      %698 = vmatprep.subr.bf16.mxu0 0
      %699 = vmatpush2.bf16.msra.mxu0 0
      %700 = vmatprep.subr.bf16.mxu0 0
      %701 = vmatpush2.bf16.msra.mxu0 0
      %702 = vmatprep.subr.bf16.mxu0 0
      %703 = vmatpush2.bf16.msra.mxu0 0
      %704 = vmatprep.subr.bf16.mxu0 0
      %705 = vmatpush2.bf16.msra.mxu0 0
      %706 = vmatprep.subr.bf16.mxu0 0
      %707 = vmatpush2.bf16.msra.mxu0 0
      %708 = vmatprep.mubr.bf16.mxu0 0
      %709 = vmatmul.mubr.bf16.gmra.mxu0 %v665
      %v710 = vpop.f32.mrf.mxu0
      %v711 = vadd.f32 0.0, %v710
      %v712 = vpop.f32.mrf.mxu0
      %v713 = vadd.f32 0.0, %v712
      %v714 = vpop.f32.mrf.mxu0
      %v715 = vpop.f32.mrf.mxu0
      %716 = vdwg.mxu0
      %717 = vmatprep.subr.bf16.mxu0 0
      %718 = vmatpush1.bf16.msra.mxu0 0
      %719 = vmatprep.subr.bf16.mxu0 0
      %720 = vmatpush1.bf16.msra.mxu0 0
      %721 = vmatprep.subr.bf16.mxu0 0
      %722 = vmatpush1.bf16.msra.mxu0 0
      %723 = vmatprep.subr.bf16.mxu0 0
      %724 = vmatpush1.bf16.msra.mxu0 0
      %725 = vmatprep.subr.bf16.mxu0 0
      %726 = vmatpush1.bf16.msra.mxu0 0
      %727 = vmatprep.subr.bf16.mxu0 0
      %728 = vmatpush1.bf16.msra.mxu0 0
      %729 = vmatprep.subr.bf16.mxu0 0
      %730 = vmatpush1.bf16.msra.mxu0 0
      %731 = vmatprep.subr.bf16.mxu0 0
      %732 = vmatpush1.bf16.msra.mxu0 %v674
      %733 = vmatprep.subr.bf16.mxu0 0
      %734 = vmatpush2.bf16.msra.mxu0 0
      %735 = vmatprep.subr.bf16.mxu0 0
      %736 = vmatpush2.bf16.msra.mxu0 0
      %737 = vmatprep.subr.bf16.mxu0 0
      %738 = vmatpush2.bf16.msra.mxu0 0
      %739 = vmatprep.subr.bf16.mxu0 0
      %740 = vmatpush2.bf16.msra.mxu0 0
      %741 = vmatprep.subr.bf16.mxu0 0
      %742 = vmatpush2.bf16.msra.mxu0 0
      %743 = vmatprep.subr.bf16.mxu0 0
      %744 = vmatpush2.bf16.msra.mxu0 0
      %745 = vmatprep.subr.bf16.mxu0 0
      %746 = vmatpush2.bf16.msra.mxu0 0
      %747 = vmatprep.subr.bf16.mxu0 0
      %748 = vmatpush2.bf16.msra.mxu0 0
      %749 = vmatprep.mubr.bf16.mxu0 0
      %750 = vmatmul.mubr.bf16.gmra.mxu0 %v665
      %v751 = vpop.f32.mrf.mxu0
      %v752 = vadd.f32 0.0, %v751
      %v753 = vpop.f32.mrf.mxu0
      %v754 = vpop.f32.mrf.mxu0
      %v755 = vpop.f32.mrf.mxu0
      %756 = vdwg.mxu0
      %v757 = vadd.f32 %v647, %v711
      %v758 = vadd.f32 %v648, %v713
      %v759 = vadd.f32 %v649, %v752
      %s760 = scalar_lea.vmem %s1, 20
      %v761 = vld [vmem:[%s760] sm:$0xf]
      %762 = vrot.lane.b32.xlu0 %v220, 108
      %v763 = vpop.permute.xlu0 %762
      %764 = vrot.lane.b32.xlu0 %v228, 108
      %v765 = vpop.permute.xlu0 %764
      %766 = vrot.lane.b32.xlu0 %v227, 108
      %v767 = vpop.permute.xlu0 %766
      %768 = vrot.lane.b32.xlu0 %v229, 108
      %v769 = vpop.permute.xlu0 %768
      %vm770 = vcmask 883712
      %v771 = vsel %vm770, %v763, %v765
      %v772 = vsel %vm770, %v765, %v767
      %v773 = vsel %vm770, %v767, %v769
      %v775 = vsel %vm242, %v761, 0
      %v778 = vsel %vm246, %v771, 0
      %v781 = vsel %vm246, %v772, 0
      %v784 = vsel %vm246, %v773, 0
      %786 = vmatprep.subr.bf16.mxu0 0
      %787 = vmatpush1.bf16.msra.mxu0 0
      %788 = vmatprep.subr.bf16.mxu0 0
      %789 = vmatpush1.bf16.msra.mxu0 0
      %790 = vmatprep.subr.bf16.mxu0 0
      %791 = vmatpush1.bf16.msra.mxu0 0
      %792 = vmatprep.subr.bf16.mxu0 0
      %793 = vmatpush1.bf16.msra.mxu0 0
      %794 = vmatprep.subr.bf16.mxu0 0
      %795 = vmatpush1.bf16.msra.mxu0 0
      %796 = vmatprep.subr.bf16.mxu0 0
      %797 = vmatpush1.bf16.msra.mxu0 0
      %798 = vmatprep.subr.bf16.mxu0 0
      %799 = vmatpush1.bf16.msra.mxu0 0
      %800 = vmatprep.subr.bf16.mxu0 %v781
      %801 = vmatpush1.bf16.msra.mxu0 %v778
      %802 = vmatprep.subr.bf16.mxu0 0
      %803 = vmatpush2.bf16.msra.mxu0 0
      %804 = vmatprep.subr.bf16.mxu0 0
      %805 = vmatpush2.bf16.msra.mxu0 0
      %806 = vmatprep.subr.bf16.mxu0 0
      %807 = vmatpush2.bf16.msra.mxu0 0
      %808 = vmatprep.subr.bf16.mxu0 0
      %809 = vmatpush2.bf16.msra.mxu0 0
      %810 = vmatprep.subr.bf16.mxu0 0
      %811 = vmatpush2.bf16.msra.mxu0 0
      %812 = vmatprep.subr.bf16.mxu0 0
      %813 = vmatpush2.bf16.msra.mxu0 0
      %814 = vmatprep.subr.bf16.mxu0 0
      %815 = vmatpush2.bf16.msra.mxu0 0
      %816 = vmatprep.subr.bf16.mxu0 0
      %817 = vmatpush2.bf16.msra.mxu0 0
      %818 = vmatprep.mubr.bf16.mxu0 0
      %819 = vmatmul.mubr.bf16.gmra.mxu0 %v775
      %v820 = vpop.f32.mrf.mxu0
      %v821 = vadd.f32 0.0, %v820
      %v822 = vpop.f32.mrf.mxu0
      %v823 = vadd.f32 0.0, %v822
      %v824 = vpop.f32.mrf.mxu0
      %v825 = vpop.f32.mrf.mxu0
      %826 = vdwg.mxu0
      %827 = vmatprep.subr.bf16.mxu0 0
      %828 = vmatpush1.bf16.msra.mxu0 0
      %829 = vmatprep.subr.bf16.mxu0 0
      %830 = vmatpush1.bf16.msra.mxu0 0
      %831 = vmatprep.subr.bf16.mxu0 0
      %832 = vmatpush1.bf16.msra.mxu0 0
      %833 = vmatprep.subr.bf16.mxu0 0
      %834 = vmatpush1.bf16.msra.mxu0 0
      %835 = vmatprep.subr.bf16.mxu0 0
      %836 = vmatpush1.bf16.msra.mxu0 0
      %837 = vmatprep.subr.bf16.mxu0 0
      %838 = vmatpush1.bf16.msra.mxu0 0
      %839 = vmatprep.subr.bf16.mxu0 0
      %840 = vmatpush1.bf16.msra.mxu0 0
      %841 = vmatprep.subr.bf16.mxu0 0
      %842 = vmatpush1.bf16.msra.mxu0 %v784
      %843 = vmatprep.subr.bf16.mxu0 0
      %844 = vmatpush2.bf16.msra.mxu0 0
      %845 = vmatprep.subr.bf16.mxu0 0
      %846 = vmatpush2.bf16.msra.mxu0 0
      %847 = vmatprep.subr.bf16.mxu0 0
      %848 = vmatpush2.bf16.msra.mxu0 0
      %849 = vmatprep.subr.bf16.mxu0 0
      %850 = vmatpush2.bf16.msra.mxu0 0
      %851 = vmatprep.subr.bf16.mxu0 0
      %852 = vmatpush2.bf16.msra.mxu0 0
      %853 = vmatprep.subr.bf16.mxu0 0
      %854 = vmatpush2.bf16.msra.mxu0 0
      %855 = vmatprep.subr.bf16.mxu0 0
      %856 = vmatpush2.bf16.msra.mxu0 0
      %857 = vmatprep.subr.bf16.mxu0 0
      %858 = vmatpush2.bf16.msra.mxu0 0
      %859 = vmatprep.mubr.bf16.mxu0 0
      %860 = vmatmul.mubr.bf16.gmra.mxu0 %v775
      %v861 = vpop.f32.mrf.mxu0
      %v862 = vadd.f32 0.0, %v861
      %v863 = vpop.f32.mrf.mxu0
      %v864 = vpop.f32.mrf.mxu0
      %v865 = vpop.f32.mrf.mxu0
      %866 = vdwg.mxu0
      %v867 = vadd.f32 %v757, %v821
      %v868 = vadd.f32 %v758, %v823
      %v869 = vadd.f32 %v759, %v862
      %s870 = scalar_lea.vmem %s1, 24
      %v871 = vld [vmem:[%s870] sm:$0xf]
      %872 = vrot.lane.b32.xlu0 %v220, 92
      %v873 = vpop.permute.xlu0 %872
      %874 = vrot.lane.b32.xlu0 %v228, 92
      %v875 = vpop.permute.xlu0 %874
      %876 = vrot.lane.b32.xlu0 %v227, 92
      %v877 = vpop.permute.xlu0 %876
      %878 = vrot.lane.b32.xlu0 %v229, 92
      %v879 = vpop.permute.xlu0 %878
      %vm880 = vcmask 752640
      %v881 = vsel %vm880, %v873, %v875
      %v882 = vsel %vm880, %v875, %v877
      %v883 = vsel %vm880, %v877, %v879
      %v885 = vsel %vm242, %v871, 0
      %v888 = vsel %vm246, %v881, 0
      %v891 = vsel %vm246, %v882, 0
      %v894 = vsel %vm246, %v883, 0
      %896 = vmatprep.subr.bf16.mxu0 0
      %897 = vmatpush1.bf16.msra.mxu0 0
      %898 = vmatprep.subr.bf16.mxu0 0
      %899 = vmatpush1.bf16.msra.mxu0 0
      %900 = vmatprep.subr.bf16.mxu0 0
      %901 = vmatpush1.bf16.msra.mxu0 0
      %902 = vmatprep.subr.bf16.mxu0 0
      %903 = vmatpush1.bf16.msra.mxu0 0
      %904 = vmatprep.subr.bf16.mxu0 0
      %905 = vmatpush1.bf16.msra.mxu0 0
      %906 = vmatprep.subr.bf16.mxu0 0
      %907 = vmatpush1.bf16.msra.mxu0 0
      %908 = vmatprep.subr.bf16.mxu0 0
      %909 = vmatpush1.bf16.msra.mxu0 0
      %910 = vmatprep.subr.bf16.mxu0 %v891
      %911 = vmatpush1.bf16.msra.mxu0 %v888
      %912 = vmatprep.subr.bf16.mxu0 0
      %913 = vmatpush2.bf16.msra.mxu0 0
      %914 = vmatprep.subr.bf16.mxu0 0
      %915 = vmatpush2.bf16.msra.mxu0 0
      %916 = vmatprep.subr.bf16.mxu0 0
      %917 = vmatpush2.bf16.msra.mxu0 0
      %918 = vmatprep.subr.bf16.mxu0 0
      %919 = vmatpush2.bf16.msra.mxu0 0
      %920 = vmatprep.subr.bf16.mxu0 0
      %921 = vmatpush2.bf16.msra.mxu0 0
      %922 = vmatprep.subr.bf16.mxu0 0
      %923 = vmatpush2.bf16.msra.mxu0 0
      %924 = vmatprep.subr.bf16.mxu0 0
      %925 = vmatpush2.bf16.msra.mxu0 0
      %926 = vmatprep.subr.bf16.mxu0 0
      %927 = vmatpush2.bf16.msra.mxu0 0
      %928 = vmatprep.mubr.bf16.mxu0 0
      %929 = vmatmul.mubr.bf16.gmra.mxu0 %v885
      %v930 = vpop.f32.mrf.mxu0
      %v931 = vadd.f32 0.0, %v930
      %v932 = vpop.f32.mrf.mxu0
      %v933 = vadd.f32 0.0, %v932
      %v934 = vpop.f32.mrf.mxu0
      %v935 = vpop.f32.mrf.mxu0
      %936 = vdwg.mxu0
      %937 = vmatprep.subr.bf16.mxu0 0
      %938 = vmatpush1.bf16.msra.mxu0 0
      %939 = vmatprep.subr.bf16.mxu0 0
      %940 = vmatpush1.bf16.msra.mxu0 0
      %941 = vmatprep.subr.bf16.mxu0 0
      %942 = vmatpush1.bf16.msra.mxu0 0
      %943 = vmatprep.subr.bf16.mxu0 0
      %944 = vmatpush1.bf16.msra.mxu0 0
      %945 = vmatprep.subr.bf16.mxu0 0
      %946 = vmatpush1.bf16.msra.mxu0 0
      %947 = vmatprep.subr.bf16.mxu0 0
      %948 = vmatpush1.bf16.msra.mxu0 0
      %949 = vmatprep.subr.bf16.mxu0 0
      %950 = vmatpush1.bf16.msra.mxu0 0
      %951 = vmatprep.subr.bf16.mxu0 0
      %952 = vmatpush1.bf16.msra.mxu0 %v894
      %953 = vmatprep.subr.bf16.mxu0 0
      %954 = vmatpush2.bf16.msra.mxu0 0
      %955 = vmatprep.subr.bf16.mxu0 0
      %956 = vmatpush2.bf16.msra.mxu0 0
      %957 = vmatprep.subr.bf16.mxu0 0
      %958 = vmatpush2.bf16.msra.mxu0 0
      %959 = vmatprep.subr.bf16.mxu0 0
      %960 = vmatpush2.bf16.msra.mxu0 0
      %961 = vmatprep.subr.bf16.mxu0 0
      %962 = vmatpush2.bf16.msra.mxu0 0
      %963 = vmatprep.subr.bf16.mxu0 0
      %964 = vmatpush2.bf16.msra.mxu0 0
      %965 = vmatprep.subr.bf16.mxu0 0
      %966 = vmatpush2.bf16.msra.mxu0 0
      %967 = vmatprep.subr.bf16.mxu0 0
      %968 = vmatpush2.bf16.msra.mxu0 0
      %969 = vmatprep.mubr.bf16.mxu0 0
      %970 = vmatmul.mubr.bf16.gmra.mxu0 %v885
      %v971 = vpop.f32.mrf.mxu0
      %v972 = vadd.f32 0.0, %v971
      %v973 = vpop.f32.mrf.mxu0
      %v974 = vpop.f32.mrf.mxu0
      %v975 = vpop.f32.mrf.mxu0
      %976 = vdwg.mxu0
      %v977 = vadd.f32 %v867, %v931
      %v978 = vadd.f32 %v868, %v933
      %v979 = vadd.f32 %v869, %v972
      %s980 = scalar_lea.vmem %s1, 28
      %v981 = vld [vmem:[%s980] sm:$0xf]
      %982 = vrot.lane.b32.xlu0 %v220, 91
      %v983 = vpop.permute.xlu0 %982
      %984 = vrot.lane.b32.xlu0 %v228, 91
      %v985 = vpop.permute.xlu0 %984
      %986 = vrot.lane.b32.xlu0 %v227, 91
      %v987 = vpop.permute.xlu0 %986
      %988 = vrot.lane.b32.xlu0 %v229, 91
      %v989 = vpop.permute.xlu0 %988
      %vm990 = vcmask 744448
      %v991 = vsel %vm990, %v983, %v985
      %v992 = vsel %vm990, %v985, %v987
      %v993 = vsel %vm990, %v987, %v989
      %v995 = vsel %vm242, %v981, 0
      %v998 = vsel %vm246, %v991, 0
      %v1001 = vsel %vm246, %v992, 0
      %v1004 = vsel %vm246, %v993, 0
      %1006 = vmatprep.subr.bf16.mxu0 0
      %1007 = vmatpush1.bf16.msra.mxu0 0
      %1008 = vmatprep.subr.bf16.mxu0 0
      %1009 = vmatpush1.bf16.msra.mxu0 0
      %1010 = vmatprep.subr.bf16.mxu0 0
      %1011 = vmatpush1.bf16.msra.mxu0 0
      %1012 = vmatprep.subr.bf16.mxu0 0
      %1013 = vmatpush1.bf16.msra.mxu0 0
      %1014 = vmatprep.subr.bf16.mxu0 0
      %1015 = vmatpush1.bf16.msra.mxu0 0
      %1016 = vmatprep.subr.bf16.mxu0 0
      %1017 = vmatpush1.bf16.msra.mxu0 0
      %1018 = vmatprep.subr.bf16.mxu0 0
      %1019 = vmatpush1.bf16.msra.mxu0 0
      %1020 = vmatprep.subr.bf16.mxu0 %v1001
      %1021 = vmatpush1.bf16.msra.mxu0 %v998
      %1022 = vmatprep.subr.bf16.mxu0 0
      %1023 = vmatpush2.bf16.msra.mxu0 0
      %1024 = vmatprep.subr.bf16.mxu0 0
      %1025 = vmatpush2.bf16.msra.mxu0 0
      %1026 = vmatprep.subr.bf16.mxu0 0
      %1027 = vmatpush2.bf16.msra.mxu0 0
      %1028 = vmatprep.subr.bf16.mxu0 0
      %1029 = vmatpush2.bf16.msra.mxu0 0
      %1030 = vmatprep.subr.bf16.mxu0 0
      %1031 = vmatpush2.bf16.msra.mxu0 0
      %1032 = vmatprep.subr.bf16.mxu0 0
      %1033 = vmatpush2.bf16.msra.mxu0 0
      %1034 = vmatprep.subr.bf16.mxu0 0
      %1035 = vmatpush2.bf16.msra.mxu0 0
      %1036 = vmatprep.subr.bf16.mxu0 0
      %1037 = vmatpush2.bf16.msra.mxu0 0
      %1038 = vmatprep.mubr.bf16.mxu0 0
      %1039 = vmatmul.mubr.bf16.gmra.mxu0 %v995
      %v1040 = vpop.f32.mrf.mxu0
      %v1041 = vadd.f32 0.0, %v1040
      %v1042 = vpop.f32.mrf.mxu0
      %v1043 = vadd.f32 0.0, %v1042
      %v1044 = vpop.f32.mrf.mxu0
      %v1045 = vpop.f32.mrf.mxu0
      %1046 = vdwg.mxu0
      %1047 = vmatprep.subr.bf16.mxu0 0
      %1048 = vmatpush1.bf16.msra.mxu0 0
      %1049 = vmatprep.subr.bf16.mxu0 0
      %1050 = vmatpush1.bf16.msra.mxu0 0
      %1051 = vmatprep.subr.bf16.mxu0 0
      %1052 = vmatpush1.bf16.msra.mxu0 0
      %1053 = vmatprep.subr.bf16.mxu0 0
      %1054 = vmatpush1.bf16.msra.mxu0 0
      %1055 = vmatprep.subr.bf16.mxu0 0
      %1056 = vmatpush1.bf16.msra.mxu0 0
      %1057 = vmatprep.subr.bf16.mxu0 0
      %1058 = vmatpush1.bf16.msra.mxu0 0
      %1059 = vmatprep.subr.bf16.mxu0 0
      %1060 = vmatpush1.bf16.msra.mxu0 0
      %1061 = vmatprep.subr.bf16.mxu0 0
      %1062 = vmatpush1.bf16.msra.mxu0 %v1004
      %1063 = vmatprep.subr.bf16.mxu0 0
      %1064 = vmatpush2.bf16.msra.mxu0 0
      %1065 = vmatprep.subr.bf16.mxu0 0
      %1066 = vmatpush2.bf16.msra.mxu0 0
      %1067 = vmatprep.subr.bf16.mxu0 0
      %1068 = vmatpush2.bf16.msra.mxu0 0
      %1069 = vmatprep.subr.bf16.mxu0 0
      %1070 = vmatpush2.bf16.msra.mxu0 0
      %1071 = vmatprep.subr.bf16.mxu0 0
      %1072 = vmatpush2.bf16.msra.mxu0 0
      %1073 = vmatprep.subr.bf16.mxu0 0
      %1074 = vmatpush2.bf16.msra.mxu0 0
      %1075 = vmatprep.subr.bf16.mxu0 0
      %1076 = vmatpush2.bf16.msra.mxu0 0
      %1077 = vmatprep.subr.bf16.mxu0 0
      %1078 = vmatpush2.bf16.msra.mxu0 0
      %1079 = vmatprep.mubr.bf16.mxu0 0
      %1080 = vmatmul.mubr.bf16.gmra.mxu0 %v995
      %v1081 = vpop.f32.mrf.mxu0
      %v1082 = vadd.f32 0.0, %v1081
      %v1083 = vpop.f32.mrf.mxu0
      %v1084 = vpop.f32.mrf.mxu0
      %v1085 = vpop.f32.mrf.mxu0
      %1086 = vdwg.mxu0
      %v1087 = vadd.f32 %v977, %v1041
      %v1088 = vadd.f32 %v978, %v1043
      %v1089 = vadd.f32 %v979, %v1082
      %s1090 = scalar_lea.vmem %s1, 32
      %v1091 = vld [vmem:[%s1090] sm:$0xf]
      %1092 = vrot.lane.b32.xlu0 %v220, 90
      %v1093 = vpop.permute.xlu0 %1092
      %1094 = vrot.lane.b32.xlu0 %v228, 90
      %v1095 = vpop.permute.xlu0 %1094
      %1096 = vrot.lane.b32.xlu0 %v227, 90
      %v1097 = vpop.permute.xlu0 %1096
      %1098 = vrot.lane.b32.xlu0 %v229, 90
      %v1099 = vpop.permute.xlu0 %1098
      %vm1100 = vcmask 736256
      %v1101 = vsel %vm1100, %v1093, %v1095
      %v1102 = vsel %vm1100, %v1095, %v1097
      %v1103 = vsel %vm1100, %v1097, %v1099
      %v1105 = vsel %vm242, %v1091, 0
      %v1108 = vsel %vm246, %v1101, 0
      %v1111 = vsel %vm246, %v1102, 0
      %v1114 = vsel %vm246, %v1103, 0
      %1116 = vmatprep.subr.bf16.mxu0 0
      %1117 = vmatpush1.bf16.msra.mxu0 0
      %1118 = vmatprep.subr.bf16.mxu0 0
      %1119 = vmatpush1.bf16.msra.mxu0 0
      %1120 = vmatprep.subr.bf16.mxu0 0
      %1121 = vmatpush1.bf16.msra.mxu0 0
      %1122 = vmatprep.subr.bf16.mxu0 0
      %1123 = vmatpush1.bf16.msra.mxu0 0
      %1124 = vmatprep.subr.bf16.mxu0 0
      %1125 = vmatpush1.bf16.msra.mxu0 0
      %1126 = vmatprep.subr.bf16.mxu0 0
      %1127 = vmatpush1.bf16.msra.mxu0 0
      %1128 = vmatprep.subr.bf16.mxu0 0
      %1129 = vmatpush1.bf16.msra.mxu0 0
      %1130 = vmatprep.subr.bf16.mxu0 %v1111
      %1131 = vmatpush1.bf16.msra.mxu0 %v1108
      %1132 = vmatprep.subr.bf16.mxu0 0
      %1133 = vmatpush2.bf16.msra.mxu0 0
      %1134 = vmatprep.subr.bf16.mxu0 0
      %1135 = vmatpush2.bf16.msra.mxu0 0
      %1136 = vmatprep.subr.bf16.mxu0 0
      %1137 = vmatpush2.bf16.msra.mxu0 0
      %1138 = vmatprep.subr.bf16.mxu0 0
      %1139 = vmatpush2.bf16.msra.mxu0 0
      %1140 = vmatprep.subr.bf16.mxu0 0
      %1141 = vmatpush2.bf16.msra.mxu0 0
      %1142 = vmatprep.subr.bf16.mxu0 0
      %1143 = vmatpush2.bf16.msra.mxu0 0
      %1144 = vmatprep.subr.bf16.mxu0 0
      %1145 = vmatpush2.bf16.msra.mxu0 0
      %1146 = vmatprep.subr.bf16.mxu0 0
      %1147 = vmatpush2.bf16.msra.mxu0 0
      %1148 = vmatprep.mubr.bf16.mxu0 0
      %1149 = vmatmul.mubr.bf16.gmra.mxu0 %v1105
      %v1150 = vpop.f32.mrf.mxu0
      %v1151 = vadd.f32 0.0, %v1150
      %v1152 = vpop.f32.mrf.mxu0
      %v1153 = vadd.f32 0.0, %v1152
      %v1154 = vpop.f32.mrf.mxu0
      %v1155 = vpop.f32.mrf.mxu0
      %1156 = vdwg.mxu0
      %1157 = vmatprep.subr.bf16.mxu0 0
      %1158 = vmatpush1.bf16.msra.mxu0 0
      %1159 = vmatprep.subr.bf16.mxu0 0
      %1160 = vmatpush1.bf16.msra.mxu0 0
      %1161 = vmatprep.subr.bf16.mxu0 0
      %1162 = vmatpush1.bf16.msra.mxu0 0
      %1163 = vmatprep.subr.bf16.mxu0 0
      %1164 = vmatpush1.bf16.msra.mxu0 0
      %1165 = vmatprep.subr.bf16.mxu0 0
      %1166 = vmatpush1.bf16.msra.mxu0 0
      %1167 = vmatprep.subr.bf16.mxu0 0
      %1168 = vmatpush1.bf16.msra.mxu0 0
      %1169 = vmatprep.subr.bf16.mxu0 0
      %1170 = vmatpush1.bf16.msra.mxu0 0
      %1171 = vmatprep.subr.bf16.mxu0 0
      %1172 = vmatpush1.bf16.msra.mxu0 %v1114
      %1173 = vmatprep.subr.bf16.mxu0 0
      %1174 = vmatpush2.bf16.msra.mxu0 0
      %1175 = vmatprep.subr.bf16.mxu0 0
      %1176 = vmatpush2.bf16.msra.mxu0 0
      %1177 = vmatprep.subr.bf16.mxu0 0
      %1178 = vmatpush2.bf16.msra.mxu0 0
      %1179 = vmatprep.subr.bf16.mxu0 0
      %1180 = vmatpush2.bf16.msra.mxu0 0
      %1181 = vmatprep.subr.bf16.mxu0 0
      %1182 = vmatpush2.bf16.msra.mxu0 0
      %1183 = vmatprep.subr.bf16.mxu0 0
      %1184 = vmatpush2.bf16.msra.mxu0 0
      %1185 = vmatprep.subr.bf16.mxu0 0
      %1186 = vmatpush2.bf16.msra.mxu0 0
      %1187 = vmatprep.subr.bf16.mxu0 0
      %1188 = vmatpush2.bf16.msra.mxu0 0
      %1189 = vmatprep.mubr.bf16.mxu0 0
      %1190 = vmatmul.mubr.bf16.gmra.mxu0 %v1105
      %v1191 = vpop.f32.mrf.mxu0
      %v1192 = vadd.f32 0.0, %v1191
      %v1193 = vpop.f32.mrf.mxu0
      %v1194 = vpop.f32.mrf.mxu0
      %v1195 = vpop.f32.mrf.mxu0
      %1196 = vdwg.mxu0
      %v1197 = vadd.f32 %v1087, %v1151
      %v1198 = vadd.f32 %v1088, %v1153
      %v1199 = vadd.f32 %v1089, %v1192
      %v1200 = vld [vmem:[%s2] sm:$0x7]
      %v1202 = vlaneseq
      %v1203 = vshrl.u32 %v1202, 7
      %v1204 = vsub.s32 0, %v1203
      %v1205 = vrot.slane %v1200, %v1204
      %v1206 = vlaneseq
      %v1207 = vshrl.u32 %v1206, 7
      %v1208 = vsub.s32 1, %v1207
      %v1209 = vrot.slane %v1200, %v1208
      %v1210 = vlaneseq
      %v1211 = vshrl.u32 %v1210, 7
      %v1212 = vsub.s32 2, %v1211
      %v1213 = vrot.slane %v1200, %v1212
      %v1217 = vmul.f32 %v1197, %v1205
      %v1218 = vmul.f32 %v1198, %v1209
      %v1219 = vmul.f32 %v1199, %v1213
      %v1220 = vadd.f32 %v1217, %v1218
      %v1221 = vadd.f32 %v1220, %v1219
      %1222 = vadd.xlane.f32.xlu0 %v1221
      %v1223 = vpop.xlane.xlu0 %1222
      %vm1224 = vcmask 7168
      %1225 = vst.msk [vmem:[%s202] sm:$0xff] %vm1224, %v1223
      %v1226 = vmul.f32 %v1197, %v1217
      %v1227 = vmul.f32 %v1198, %v1218
      %v1228 = vmul.f32 %v1199, %v1219
      %v1229 = vadd.f32 %v1226, %v1227
      %v1230 = vadd.f32 %v1229, %v1228
      %1231 = vadd.xlane.f32.xlu0 %v1230
      %v1232 = vpop.xlane.xlu0 %1231
      %1233 = vst.msk [vmem:[%s206] sm:$0xff] %vm1224, %v1232
      %p1234 = scmp.lt.s32.totalorder %s16, 1
      %s1235 = scalar_select %p1234, %s16, 1
      %s1236 = smul.addr %s1235, 8
      %s1237 = scalar_lea.vmem %s3, %s1236
      %p1238 = scmp.lt.s32.totalorder %s16, 1
      %s1239 = scalar_select %p1238, %s16, 1
      %s1240 = smul.addr %s1239, 8
      %s1241 = scalar_lea.vmem %s4, %s1240
      // Predicated region
      $region33: #{basic_conv_forward.2} parent=31 // pred_check
        %p1242 = pneg %p102
      $region34: #{basic_conv_forward.2} parent=31 // pred_check_branch
        %1244 = sbr.rel (%p1242) target = $region36
      $region35: #{basic_conv_forward.2} parent=31 // pred_region
        _
      $region36: #{basic_conv_forward.2} parent=31 // pred_fallthru
        _
      // Predicated region
      $region37: #{basic_conv_forward.2} parent=31 // pred_check
        %p1245 = pneg %p128
      $region38: #{basic_conv_forward.2} parent=31 // pred_check_branch
        %1247 = sbr.rel (%p1245) target = $region40
      $region39: #{basic_conv_forward.2} parent=31 // pred_region
        _
      $region40: #{basic_conv_forward.2} parent=31 // pred_fallthru
        _
    $region32: #{basic_conv_forward.2} parent=5 // pred_fallthru
      _
    %p1248 = scmp.le.s32.totalorder 2, %s11
    // Predicated region
    $region41: #{basic_conv_forward.2} parent=5 // pred_check
      %p1249 = pneg %p1248
    $region42: #{basic_conv_forward.2} parent=5 // pred_check_branch
      %1251 = sbr.rel (%p1249) target = $region44
    $region43: #{basic_conv_forward.2} parent=5 // pred_region
      %s1252 = ssub.s32 %s11, 2
      // Predicated region
      $region45: #{basic_conv_forward.2} parent=43 // pred_check
        %p1253 = pneg %p108
      $region46: #{basic_conv_forward.2} parent=43 // pred_check_branch
        %1255 = sbr.rel (%p1253) target = $region48
      $region47: #{basic_conv_forward.2} parent=43 // pred_region
        %p1256 = scmp.lt.s32.totalorder %s17, 1
        %s1257 = scalar_select %p1256, %s17, 1
        %s1258 = smul.addr %s1257, 8
        %s1259 = scalar_lea.vmem %s3, %s1258
      $region48: #{basic_conv_forward.2} parent=43 // pred_fallthru
        _
      // Predicated region
      $region49: #{basic_conv_forward.2} parent=43 // pred_check
        %p1260 = pneg %p134
      $region50: #{basic_conv_forward.2} parent=43 // pred_check_branch
        %1262 = sbr.rel (%p1260) target = $region52
      $region51: #{basic_conv_forward.2} parent=43 // pred_region
        %p1263 = scmp.lt.s32.totalorder %s17, 1
        %s1264 = scalar_select %p1263, %s17, 1
        %s1265 = smul.addr %s1264, 8
        %s1266 = scalar_lea.vmem %s4, %s1265
      $region52: #{basic_conv_forward.2} parent=43 // pred_fallthru
        _
    $region44: #{basic_conv_forward.2} parent=5 // pred_fallthru
      _
  $region6: #{basic_conv_forward.2} parent=0 // loop_footer
    %s15 = sadd.s32 1, %s11
  $region7: #{basic_conv_forward.2} parent=0 // loop_footer_branch
    %10 = sbr.rel target = $region3
  $region8: #{basic_conv_forward.2} parent=0 // loop_exit
    _

</llo_original>
